<compile_context>
chip_gen: v6e
topology: v6e:2x2x1
jax: 0.10.0
libtpu: 0.0.40
codegen_flags: <defaults>
</compile_context>

<pallas_src>
import functools

import jax
import jax.numpy as jnp
from jax.experimental import pallas as pl
from jax.experimental.pallas import tpu as pltpu


def _round_up(x, m):
    return (x + m - 1) // m * m


def _choose_tm(m):
    """Largest M tile in {512, 256, 128} whose zero-padding waste is small."""
    for tm in (512, 256, 128):
        mp = _round_up(m, tm)
        if mp - m <= max(m // 8, 0):
            return tm, mp
    return 128, _round_up(m, 128)


def _pad_rows(a, mp):
    m = a.shape[0]
    if mp != m:
        a = jnp.pad(a, ((0, mp - m), (0, 0)))
    return a


def _compiler_params(semantics):
    return pltpu.CompilerParams(dimension_semantics=semantics)


# ---------------------------------------------------------------------------
# Kernel bodies
# ---------------------------------------------------------------------------
def _mm_bias_kernel(x_ref, w_ref, b_ref, o_ref, *, relu):
    """o = x @ w + b (optional ReLU).  BN scale pre-folded into w (bf16)."""
    acc = jnp.dot(x_ref[...], w_ref[...], preferred_element_type=jnp.float32)
    y = acc + b_ref[...]
    if relu:
        y = jnp.maximum(y, 0.0)
    o_ref[...] = y.astype(o_ref.dtype)


def _mm_bias_res_kernel(x_ref, w_ref, b_ref, r_ref, o_ref, *, relu):
    """o = x @ w + b + r (optional ReLU).  Residual streamed in f32."""
    acc = jnp.dot(x_ref[...], w_ref[...], preferred_element_type=jnp.float32)
    y = acc + b_ref[...] + r_ref[...].astype(jnp.float32)
    if relu:
        y = jnp.maximum(y, 0.0)
    o_ref[...] = y.astype(o_ref.dtype)


def _dual_mm_bias_relu_kernel(x_ref, w_ref, r_ref, wr_ref, b_ref, o_ref):
    """o = relu(x @ w + r @ wr + b): final 1x1 conv with fused downsample."""
    acc = jnp.dot(x_ref[...], w_ref[...], preferred_element_type=jnp.float32)
    acc = acc + jnp.dot(r_ref[...], wr_ref[...],
                        preferred_element_type=jnp.float32)
    y = jnp.maximum(acc + b_ref[...], 0.0)
    o_ref[...] = y.astype(o_ref.dtype)


def _conv3x3_kernel(x0_ref, x1_ref, x2_ref, w_ref, b_ref, o_ref, *, wo):
    """3x3 conv row: one output row, 3 row-tap dots with K = 3*Cbp each.

    x{dy}_ref: (1, 1, wo_pad, 3*Cbp) — padded-input row (i*s + dy) with the
               three column taps pre-gathered into the channel dim.
    w_ref:     (3, 3*Cbp, Coutp)     — BN-folded tap weights (resident).
    """
    acc = jnp.dot(x0_ref[0, 0], w_ref[0], preferred_element_type=jnp.float32)
    acc = acc + jnp.dot(x1_ref[0, 0], w_ref[1],
                        preferred_element_type=jnp.float32)
    acc = acc + jnp.dot(x2_ref[0, 0], w_ref[2],
                        preferred_element_type=jnp.float32)
    y = jnp.maximum(acc + b_ref[...], 0.0)
    o_ref[0, 0] = y[:wo].astype(o_ref.dtype)


# ---------------------------------------------------------------------------
# Wrappers (tiling, padding, BN folding glue)
# ---------------------------------------------------------------------------
def fused_matmul_bias(x2d, w, bias, *, relu, residual=None,
                      out_dtype=jnp.bfloat16):
    """y = x2d @ w + bias (+ residual) (opt. ReLU); weight stays VMEM-resident."""
    m, k = x2d.shape
    npad = w.shape[1]
    tm, mp = _choose_tm(m)
    xp = _pad_rows(x2d.astype(jnp.bfloat16), mp)
    bias2 = bias.reshape(1, npad).astype(jnp.float32)

    in_specs = [
        pl.BlockSpec((tm, k), lambda i: (i, 0)),
        pl.BlockSpec((k, npad), lambda i: (0, 0)),      # resident weight
        pl.BlockSpec((1, npad), lambda i: (0, 0)),      # resident bias
    ]
    args = [xp, w.astype(jnp.bfloat16), bias2]
    if residual is None:
        kernel = functools.partial(_mm_bias_kernel, relu=relu)
    else:
        kernel = functools.partial(_mm_bias_res_kernel, relu=relu)
        rp = _pad_rows(residual, mp)                    # f32 identity add
        in_specs.append(pl.BlockSpec((tm, npad), lambda i: (i, 0)))
        args.append(rp)

    bytes_accessed = sum(int(a.size) * a.dtype.itemsize for a in args)
    bytes_accessed += mp * npad * jnp.dtype(out_dtype).itemsize
    out = pl.pallas_call(
        kernel,
        out_shape=jax.ShapeDtypeStruct((mp, npad), out_dtype),
        grid=(mp // tm,),
        in_specs=in_specs,
        out_specs=pl.BlockSpec((tm, npad), lambda i: (i, 0)),
        compiler_params=_compiler_params(("parallel",)),
        cost_estimate=pl.CostEstimate(flops=int(2 * mp * k * npad),
                                      transcendentals=0,
                                      bytes_accessed=int(bytes_accessed)),
    )(*args)
    return out[:m]


def fused_dual_matmul_bias_relu(x2d, w, r2d, wr, bias, *,
                                out_dtype=jnp.bfloat16):
    """relu(x2d @ w + r2d @ wr + bias): conv3 + fused downsample + residual."""
    m, k = x2d.shape
    kr = r2d.shape[1]
    npad = w.shape[1]
    tm, mp = _choose_tm(m)
    xp = _pad_rows(x2d.astype(jnp.bfloat16), mp)
    rp = _pad_rows(r2d.astype(jnp.bfloat16), mp)
    bias2 = bias.reshape(1, npad).astype(jnp.float32)
    args = [xp, w.astype(jnp.bfloat16), rp, wr.astype(jnp.bfloat16), bias2]
    bytes_accessed = sum(int(a.size) * a.dtype.itemsize for a in args)
    bytes_accessed += mp * npad * jnp.dtype(out_dtype).itemsize
    out = pl.pallas_call(
        _dual_mm_bias_relu_kernel,
        out_shape=jax.ShapeDtypeStruct((mp, npad), out_dtype),
        grid=(mp // tm,),
        in_specs=[
            pl.BlockSpec((tm, k), lambda i: (i, 0)),
            pl.BlockSpec((k, npad), lambda i: (0, 0)),      # resident
            pl.BlockSpec((tm, kr), lambda i: (i, 0)),
            pl.BlockSpec((kr, npad), lambda i: (0, 0)),     # resident
            pl.BlockSpec((1, npad), lambda i: (0, 0)),      # resident
        ],
        out_specs=pl.BlockSpec((tm, npad), lambda i: (i, 0)),
        compiler_params=_compiler_params(("parallel",)),
        cost_estimate=pl.CostEstimate(flops=int(2 * mp * (k + kr) * npad),
                                      transcendentals=0,
                                      bytes_accessed=int(bytes_accessed)),
    )(*args)
    return out[:m]


def conv3x3_bn_relu(y_nhwc, w_taps, bias, stride):
    """3x3 conv (stride, pad=1) + BN bias + ReLU, tiled over output rows.

    y_nhwc: (N, H, W, Cbp) bf16, channels zero-padded to a multiple of 128.
    w_taps: (3, 3*Cbp, Coutp) bf16, K laid out as dx*Cbp + cin.
    """
    n, h, w, cbp = y_nhwc.shape
    coutp = w_taps.shape[-1]
    s = stride
    ho = (h - 1) // s + 1
    wo = (w - 1) // s + 1
    wo_pad = _round_up(wo, 8)
    wp = max(w + 2, s * wo_pad + 3 - s)
    # Static guards: every row / column tap read stays inside the padded input.
    assert (ho - 1) * s + 2 <= h + 1
    assert 2 + s * (wo_pad - 1) <= wp - 1

    xp = jnp.pad(y_nhwc, ((0, 0), (1, 1), (1, wp - (w + 1)), (0, 0)))
    # Column-tap gather ("pre-shifted copy"): the channel dim carries the three
    # horizontal taps, so each row-tap dot in the kernel has K = 3*Cbp and no
    # unaligned sublane slices are needed.
    xcol = jnp.concatenate(
        [xp[:, :, dx:dx + s * wo_pad:s, :] for dx in range(3)], axis=-1)
    bias2 = bias.reshape(1, coutp).astype(jnp.float32)

    kernel = functools.partial(_conv3x3_kernel, wo=wo)
    x_specs = [
        pl.BlockSpec((1, 1, wo_pad, 3 * cbp),
                     lambda nn, ii, dy=dy: (nn, ii * s + dy, 0, 0))
        for dy in range(3)
    ]
    flops = 2 * n * ho * wo_pad * (9 * cbp) * coutp
    bytes_accessed = (3 * int(xcol.size) * 2 + int(w_taps.size) * 2
                      + n * ho * wo * coutp * 2)
    out = pl.pallas_call(
        kernel,
        out_shape=jax.ShapeDtypeStruct((n, ho, wo, coutp), jnp.bfloat16),
        grid=(n, ho),
        in_specs=x_specs + [
            pl.BlockSpec((3, 3 * cbp, coutp), lambda nn, ii: (0, 0, 0)),
            pl.BlockSpec((1, coutp), lambda nn, ii: (0, 0)),
        ],
        out_specs=pl.BlockSpec((1, 1, wo, coutp), lambda nn, ii: (nn, ii, 0, 0)),
        compiler_params=_compiler_params(("parallel", "parallel")),
        cost_estimate=pl.CostEstimate(flops=int(flops), transcendentals=0,
                                      bytes_accessed=int(bytes_accessed)),
    )(xcol, xcol, xcol, w_taps, bias2)
    return out


# ---------------------------------------------------------------------------
# BN folding, parameter init, bottleneck forward
# ---------------------------------------------------------------------------
def bn_scale_bias(gamma, beta, mean, var, eps=1e-5):
    scale = gamma / jnp.sqrt(var + eps)
    return scale, beta - mean * scale


def init_bottleneck_params(key, in_channels, block_channels, stride,
                           with_downsample):
    expansion = 4
    out_channels = block_channels * expansion
    keys = jax.random.split(key, 16)

    def conv_w(k, cout, cin, kh, kw):
        fan = cin * kh * kw
        return jax.random.normal(k, (cout, cin, kh, kw), jnp.float32) * (2.0 / fan) ** 0.5

    def bn(kg, kb, km, kv, c):
        return dict(
            gamma=jax.random.uniform(kg, (c,), jnp.float32, 0.5, 1.5),
            beta=0.1 * jax.random.normal(kb, (c,), jnp.float32),
            mean=0.1 * jax.random.normal(km, (c,), jnp.float32),
            var=jax.random.uniform(kv, (c,), jnp.float32, 0.5, 1.5),
        )

    params = dict(
        conv1_w=conv_w(keys[0], block_channels, in_channels, 1, 1),
        bn1=bn(keys[1], keys[2], keys[3], keys[4], block_channels),
        conv2_w=conv_w(keys[5], block_channels, block_channels, 3, 3),
        bn2=bn(keys[6], keys[7], keys[8], keys[9], block_channels),
        conv3_w=conv_w(keys[10], out_channels, block_channels, 1, 1),
        bn3=bn(keys[11], keys[12], keys[13], keys[14], out_channels),
    )
    if with_downsample:
        dk = jax.random.split(keys[15], 5)
        params["ds_w"] = conv_w(dk[0], out_channels, in_channels, 1, 1)
        params["bn_ds"] = bn(dk[1], dk[2], dk[3], dk[4], out_channels)
    return params


def bottleneck_forward(params, x_nchw, stride, out_dtype=jnp.bfloat16):
    x = jnp.transpose(x_nchw, (0, 2, 3, 1)).astype(jnp.float32)   # NCHW -> NHWC
    n, h, w, cin = x.shape
    cb = params["conv1_w"].shape[0]
    cout = params["conv3_w"].shape[0]
    cbp = _round_up(cb, 128)           # lane-dense channel padding
    coutp = _round_up(cout, 128)
    ho = (h - 1) // stride + 1
    wo = (w - 1) // stride + 1

    # conv1x1_1 + BN + ReLU (BN scale folded into the bf16 weight)
    s1v, b1v = bn_scale_bias(**params["bn1"])
    w1 = params["conv1_w"][:, :, 0, 0].T * s1v[None, :]            # (Cin, Cb)
    w1p = jnp.pad(w1, ((0, 0), (0, cbp - cb))).astype(jnp.bfloat16)
    b1p = jnp.pad(b1v, (0, cbp - cb)).astype(jnp.float32)
    y1 = fused_matmul_bias(x.reshape(n * h * w, cin), w1p, b1p, relu=True,
                           out_dtype=jnp.bfloat16)
    y1 = y1.reshape(n, h, w, cbp)

    # conv3x3 (stride, pad=1) + BN + ReLU — row-tiled, K = 3*Cbp per dot
    s2v, b2v = bn_scale_bias(**params["bn2"])
    w2 = jnp.transpose(params["conv2_w"], (2, 3, 1, 0)) * s2v      # (3,3,Cb,Cb)
    w2p = jnp.pad(w2, ((0, 0), (0, 0), (0, cbp - cb), (0, cbp - cb)))
    w2p = w2p.reshape(3, 3 * cbp, cbp).astype(jnp.bfloat16)
    b2p = jnp.pad(b2v, (0, cbp - cb)).astype(jnp.float32)
    y2 = conv3x3_bn_relu(y1, w2p, b2p, stride)                     # (N,Ho,Wo,Cbp)
    y2_2d = y2.reshape(n * ho * wo, cbp)

    # conv1x1_2 + BN (+ fused downsample conv1x1 + BN) + residual + ReLU
    s3v, b3v = bn_scale_bias(**params["bn3"])
    w3 = params["conv3_w"][:, :, 0, 0].T * s3v[None, :]            # (Cb, Cout)
    w3p = jnp.pad(w3, ((0, cbp - cb), (0, coutp - cout))).astype(jnp.bfloat16)
    if "ds_w" in params:
        sdv, bdv = bn_scale_bias(**params["bn_ds"])
        wd = params["ds_w"][:, :, 0, 0].T * sdv[None, :]           # (Cin, Cout)
        wdp = jnp.pad(wd, ((0, 0), (0, coutp - cout))).astype(jnp.bfloat16)
        bfused = jnp.pad(b3v + bdv, (0, coutp - cout)).astype(jnp.float32)
        idn = x[:, ::stride, ::stride, :].reshape(n * ho * wo, cin)
        out2d = fused_dual_matmul_bias_relu(y2_2d, w3p, idn, wdp, bfused,
                                            out_dtype=out_dtype)
    else:
        b3p = jnp.pad(b3v, (0, coutp - cout)).astype(jnp.float32)
        idn = x[:, ::stride, ::stride, :].reshape(n * ho * wo, cin)
        idn = jnp.pad(idn, ((0, 0), (0, coutp - cin))).astype(jnp.float32)
        out2d = fused_matmul_bias(y2_2d, w3p, b3p, relu=True, residual=idn,
                                  out_dtype=out_dtype)
    out = out2d.reshape(n, ho, wo, coutp)[..., :cout]
    return jnp.transpose(out, (0, 3, 1, 2))                        # NHWC -> NCHW


bottleneck_forward_jit = jax.jit(bottleneck_forward, static_argnums=(2,))


# ---------------------------------------------------------------------------
# Pure-JAX f32 reference (module semantics, for correctness check)
# ---------------------------------------------------------------------------
def _conv_ref(x_nhwc, w_oihw, stride, padding):
    return jax.lax.conv_general_dilated(
        x_nhwc, jnp.transpose(w_oihw, (2, 3, 1, 0)),
        window_strides=(stride, stride), padding=padding,
        dimension_numbers=("NHWC", "HWIO", "NHWC"))


def bottleneck_ref(params, x_nchw, stride):
    x = jnp.transpose(x_nchw, (0, 2, 3, 1)).astype(jnp.float32)
    identity = x

    def bn_apply(y, p):
        s, b = bn_scale_bias(**p)
        return y * s + b

    y = jax.nn.relu(bn_apply(_conv_ref(x, params["conv1_w"], 1, "VALID"), params["bn1"]))
    y = jax.nn.relu(bn_apply(_conv_ref(y, params["conv2_w"], stride, [(1, 1), (1, 1)]),
                             params["bn2"]))
    y = bn_apply(_conv_ref(y, params["conv3_w"], 1, "VALID"), params["bn3"])
    if "ds_w" in params:
        identity = bn_apply(_conv_ref(identity, params["ds_w"], stride, "VALID"),
                            params["bn_ds"])
    out = jax.nn.relu(y + identity)
    return jnp.transpose(out, (0, 3, 1, 2))


if __name__ == "__main__":
    key = jax.random.PRNGKey(0)
    k1, k2, k3, k4 = jax.random.split(key, 4)

    def round_bf16(t):
        # Make test operands exactly bf16-representable so the f32 reference
        # isolates kernel error (bf16 is the kernels' operand dtype).
        return jax.tree_util.tree_map(
            lambda a: a.astype(jnp.bfloat16).astype(jnp.float32), t)

    # Config 1: stride-2 bottleneck with 1x1+BN identity downsample
    # (in=16, block=8 -> out=32), x NCHW (2, 16, 16, 16).
    x1 = round_bf16(jax.random.normal(k1, (2, 16, 16, 16), jnp.float32))
    p1 = round_bf16(init_bottleneck_params(k2, 16, 8, 2, with_downsample=True))
    out1 = jax.block_until_ready(bottleneck_forward_jit(p1, x1, 2))
    ref1 = jax.block_until_ready(bottleneck_ref(p1, x1, 2))
    assert out1.shape == (2, 32, 8, 8), out1.shape
    assert jnp.allclose(out1.astype(jnp.float32), ref1, atol=2e-1, rtol=1e-1), \
        float(jnp.max(jnp.abs(out1.astype(jnp.float32) - ref1)))

    # Config 2: stride-1 bottleneck, no downsample (in = out = 32, block=8).
    x2 = round_bf16(jax.random.normal(k3, (2, 32, 16, 16), jnp.float32))
    p2 = round_bf16(init_bottleneck_params(k4, 32, 8, 1, with_downsample=False))
    out2 = jax.block_until_ready(bottleneck_forward_jit(p2, x2, 1))
    ref2 = jax.block_until_ready(bottleneck_ref(p2, x2, 1))
    assert out2.shape == (2, 32, 16, 16), out2.shape
    assert jnp.allclose(out2.astype(jnp.float32), ref2, atol=2e-1, rtol=1e-1), \
        float(jnp.max(jnp.abs(out2.astype(jnp.float32) - ref2)))

    print("KERNEL_OK")
</pallas_src>

<mosaic_0001>
module attributes {stable_mosaic.version = 11 : i64} {
  func.func @_mm_bias_kernel(%arg0: i32, %arg1: memref<512x16xbf16, #tpu.memory_space<vmem>>, %arg2: memref<16x128xbf16, #tpu.memory_space<vmem>>, %arg3: memref<1x128xf32, #tpu.memory_space<vmem>>, %arg4: memref<512x128xbf16, #tpu.memory_space<vmem>>) attributes {dimension_semantics = [#tpu.dimension_semantics<parallel>], iteration_bounds = array<i64: 1>, scalar_prefetch = 0 : i64, scratch_operands = 0 : i64, tpu.core_type = #tpu.core_type<tc>, window_params = [{transform_indices = @transform_0, window_bounds = array<i64: 512, 16>}, {pipeline_mode = #tpu.pipeline_mode<synchronous>, transform_indices = @transform_1, window_bounds = array<i64: 16, 128>}, {pipeline_mode = #tpu.pipeline_mode<synchronous>, transform_indices = @transform_2, window_bounds = array<i64: 1, 128>}, {transform_indices = @transform_3, window_bounds = array<i64: 512, 128>}]} {
    %c0 = arith.constant 0 : index
    %c0_0 = arith.constant 0 : index
    %0 = vector.load %arg1[%c0, %c0_0] : memref<512x16xbf16, #tpu.memory_space<vmem>>, vector<512x16xbf16>
    %c0_1 = arith.constant 0 : index
    %c0_2 = arith.constant 0 : index
    %1 = vector.load %arg2[%c0_1, %c0_2] : memref<16x128xbf16, #tpu.memory_space<vmem>>, vector<16x128xbf16>
    %cst = arith.constant dense<0.000000e+00> : vector<512x128xf32>
    %2 = tpu.matmul %0, %1, %cst {dimension_numbers = #tpu.dot_dimension_numbers<[1], [0], [0], [1], [0, 0, 1, 1], [], []>} : vector<512x16xbf16>, vector<16x128xbf16>, vector<512x128xf32> -> vector<512x128xf32>
    %c0_3 = arith.constant 0 : index
    %c0_4 = arith.constant 0 : index
    %3 = vector.load %arg3[%c0_3, %c0_4] : memref<1x128xf32, #tpu.memory_space<vmem>>, vector<1x128xf32>
    %4 = vector.broadcast %3 : vector<1x128xf32> to vector<512x128xf32>
    %5 = arith.addf %2, %4 : vector<512x128xf32>
    %cst_5 = arith.constant 0.000000e+00 : f32
    %6 = vector.broadcast %cst_5 : f32 to vector<512x128xf32>
    %7 = arith.maximumf %5, %6 : vector<512x128xf32>
    %8 = arith.truncf %7 : vector<512x128xf32> to vector<512x128xbf16>
    %c0_6 = arith.constant 0 : index
    %c0_7 = arith.constant 0 : index
    %9 = vector.load %arg4[%c0_6, %c0_7] : memref<512x128xbf16, #tpu.memory_space<vmem>>, vector<512x128xbf16>
    tpu.vector_store %arg4[%c0_6, %c0_7], %8 {strides = array<i32>} : memref<512x128xbf16, #tpu.memory_space<vmem>>, vector<512x128xbf16>,
    return
  }
  func.func @transform_0(%arg0: i32) -> (i32, i32) {
    %c0_i32 = arith.constant 0 : i32
    %c0_i32_0 = arith.constant 0 : i32
    return %arg0, %c0_i32 : i32, i32
  }
  func.func @transform_1(%arg0: i32) -> (i32, i32) {
    %c0_i32 = arith.constant 0 : i32
    %c0_i32_0 = arith.constant 0 : i32
    %c0_i32_1 = arith.constant 0 : i32
    return %c0_i32, %c0_i32_0 : i32, i32
  }
  func.func @transform_2(%arg0: i32) -> (i32, i32) {
    %c0_i32 = arith.constant 0 : i32
    %c0_i32_0 = arith.constant 0 : i32
    %c0_i32_1 = arith.constant 0 : i32
    return %c0_i32, %c0_i32_0 : i32, i32
  }
  func.func @transform_3(%arg0: i32) -> (i32, i32) {
    %c0_i32 = arith.constant 0 : i32
    %c0_i32_0 = arith.constant 0 : i32
    return %arg0, %c0_i32 : i32, i32
  }
}

module attributes {stable_mosaic.version = 11 : i64} {
  func.func @_conv3x3_kernel(%arg0: i32, %arg1: i32, %arg2: memref<1x1x8x384xbf16, #tpu.memory_space<vmem>>, %arg3: memref<1x1x8x384xbf16, #tpu.memory_space<vmem>>, %arg4: memref<1x1x8x384xbf16, #tpu.memory_space<vmem>>, %arg5: memref<3x384x128xbf16, #tpu.memory_space<vmem>>, %arg6: memref<1x128xf32, #tpu.memory_space<vmem>>, %arg7: memref<1x1x8x128xbf16, #tpu.memory_space<vmem>>) attributes {dimension_semantics = [#tpu.dimension_semantics<parallel>, #tpu.dimension_semantics<parallel>], iteration_bounds = array<i64: 2, 8>, scalar_prefetch = 0 : i64, scratch_operands = 0 : i64, tpu.core_type = #tpu.core_type<tc>, window_params = [{transform_indices = @transform_0, window_bounds = array<i64: 1, 1, 8, 384>}, {transform_indices = @transform_1, window_bounds = array<i64: 1, 1, 8, 384>}, {transform_indices = @transform_2, window_bounds = array<i64: 1, 1, 8, 384>}, {pipeline_mode = #tpu.pipeline_mode<synchronous>, transform_indices = @transform_3, window_bounds = array<i64: 3, 384, 128>}, {pipeline_mode = #tpu.pipeline_mode<synchronous>, transform_indices = @transform_4, window_bounds = array<i64: 1, 128>}, {transform_indices = @transform_5, window_bounds = array<i64: 1, 1, 8, 128>}]} {
    %c0 = arith.constant 0 : index
    %c0_0 = arith.constant 0 : index
    %c0_1 = arith.constant 0 : index
    %c0_2 = arith.constant 0 : index
    %0 = vector.load %arg2[%c0, %c0_0, %c0_1, %c0_2] : memref<1x1x8x384xbf16, #tpu.memory_space<vmem>>, vector<1x1x8x384xbf16>
    %1 = vector.shape_cast %0 : vector<1x1x8x384xbf16> to vector<8x384xbf16>
    %c0_3 = arith.constant 0 : index
    %c0_4 = arith.constant 0 : index
    %c0_5 = arith.constant 0 : index
    %2 = vector.load %arg5[%c0_3, %c0_4, %c0_5] : memref<3x384x128xbf16, #tpu.memory_space<vmem>>, vector<1x384x128xbf16>
    %3 = vector.shape_cast %2 : vector<1x384x128xbf16> to vector<384x128xbf16>
    %cst = arith.constant dense<0.000000e+00> : vector<8x128xf32>
    %4 = tpu.matmul %1, %3, %cst {dimension_numbers = #tpu.dot_dimension_numbers<[1], [0], [0], [1], [0, 0, 1, 1], [], []>} : vector<8x384xbf16>, vector<384x128xbf16>, vector<8x128xf32> -> vector<8x128xf32>
    %c0_6 = arith.constant 0 : index
    %c0_7 = arith.constant 0 : index
    %c0_8 = arith.constant 0 : index
    %c0_9 = arith.constant 0 : index
    %5 = vector.load %arg3[%c0_6, %c0_7, %c0_8, %c0_9] : memref<1x1x8x384xbf16, #tpu.memory_space<vmem>>, vector<1x1x8x384xbf16>
    %6 = vector.shape_cast %5 : vector<1x1x8x384xbf16> to vector<8x384xbf16>
    %c1 = arith.constant 1 : index
    %c0_10 = arith.constant 0 : index
    %c0_11 = arith.constant 0 : index
    %7 = vector.load %arg5[%c1, %c0_10, %c0_11] : memref<3x384x128xbf16, #tpu.memory_space<vmem>>, vector<1x384x128xbf16>
    %8 = vector.shape_cast %7 : vector<1x384x128xbf16> to vector<384x128xbf16>
    %cst_12 = arith.constant dense<0.000000e+00> : vector<8x128xf32>
    %9 = tpu.matmul %6, %8, %cst_12 {dimension_numbers = #tpu.dot_dimension_numbers<[1], [0], [0], [1], [0, 0, 1, 1], [], []>} : vector<8x384xbf16>, vector<384x128xbf16>, vector<8x128xf32> -> vector<8x128xf32>
    %10 = arith.addf %4, %9 : vector<8x128xf32>
    %c0_13 = arith.constant 0 : index
    %c0_14 = arith.constant 0 : index
    %c0_15 = arith.constant 0 : index
    %c0_16 = arith.constant 0 : index
    %11 = vector.load %arg4[%c0_13, %c0_14, %c0_15, %c0_16] : memref<1x1x8x384xbf16, #tpu.memory_space<vmem>>, vector<1x1x8x384xbf16>
    %12 = vector.shape_cast %11 : vector<1x1x8x384xbf16> to vector<8x384xbf16>
    %c2 = arith.constant 2 : index
    %c0_17 = arith.constant 0 : index
    %c0_18 = arith.constant 0 : index
    %13 = vector.load %arg5[%c2, %c0_17, %c0_18] : memref<3x384x128xbf16, #tpu.memory_space<vmem>>, vector<1x384x128xbf16>
    %14 = vector.shape_cast %13 : vector<1x384x128xbf16> to vector<384x128xbf16>
    %cst_19 = arith.constant dense<0.000000e+00> : vector<8x128xf32>
    %15 = tpu.matmul %12, %14, %cst_19 {dimension_numbers = #tpu.dot_dimension_numbers<[1], [0], [0], [1], [0, 0, 1, 1], [], []>} : vector<8x384xbf16>, vector<384x128xbf16>, vector<8x128xf32> -> vector<8x128xf32>
    %16 = arith.addf %10, %15 : vector<8x128xf32>
    %c0_20 = arith.constant 0 : index
    %c0_21 = arith.constant 0 : index
    %17 = vector.load %arg6[%c0_20, %c0_21] : memref<1x128xf32, #tpu.memory_space<vmem>>, vector<1x128xf32>
    %18 = vector.broadcast %17 : vector<1x128xf32> to vector<8x128xf32>
    %19 = arith.addf %16, %18 : vector<8x128xf32>
    %cst_22 = arith.constant 0.000000e+00 : f32
    %20 = vector.broadcast %cst_22 : f32 to vector<8x128xf32>
    %21 = arith.maximumf %19, %20 : vector<8x128xf32>
    %22 = arith.truncf %21 : vector<8x128xf32> to vector<8x128xbf16>
    %c0_23 = arith.constant 0 : index
    %c0_24 = arith.constant 0 : index
    %c0_25 = arith.constant 0 : index
    %c0_26 = arith.constant 0 : index
    %23 = vector.load %arg7[%c0_23, %c0_24, %c0_25, %c0_26] : memref<1x1x8x128xbf16, #tpu.memory_space<vmem>>, vector<1x1x8x128xbf16>
    %24 = vector.shape_cast %23 : vector<1x1x8x128xbf16> to vector<8x128xbf16>
    %25 = vector.shape_cast %22 : vector<8x128xbf16> to vector<1x1x8x128xbf16>
    tpu.vector_store %arg7[%c0_23, %c0_24, %c0_25, %c0_26], %25 {strides = array<i32>} : memref<1x1x8x128xbf16, #tpu.memory_space<vmem>>, vector<1x1x8x128xbf16>,
    return
  }
  func.func @transform_0(%arg0: i32, %arg1: i32) -> (i32, i32, i32, i32) {
    %c2_i32 = arith.constant 2 : i32
    %0 = arith.muli %arg1, %c2_i32 : i32
    %c0_i32 = arith.constant 0 : i32
    %1 = arith.addi %0, %c0_i32 : i32
    %c0_i32_0 = arith.constant 0 : i32
    %c0_i32_1 = arith.constant 0 : i32
    %c0_i32_2 = arith.constant 0 : i32
    return %arg0, %1, %c0_i32_0, %c0_i32_1 : i32, i32, i32, i32
  }
  func.func @transform_1(%arg0: i32, %arg1: i32) -> (i32, i32, i32, i32) {
    %c2_i32 = arith.constant 2 : i32
    %0 = arith.muli %arg1, %c2_i32 : i32
    %c1_i32 = arith.constant 1 : i32
    %1 = arith.addi %0, %c1_i32 : i32
    %c0_i32 = arith.constant 0 : i32
    %c0_i32_0 = arith.constant 0 : i32
    %c0_i32_1 = arith.constant 0 : i32
    return %arg0, %1, %c0_i32, %c0_i32_0 : i32, i32, i32, i32
  }
  func.func @transform_2(%arg0: i32, %arg1: i32) -> (i32, i32, i32, i32) {
    %c2_i32 = arith.constant 2 : i32
    %0 = arith.muli %arg1, %c2_i32 : i32
    %c2_i32_0 = arith.constant 2 : i32
    %1 = arith.addi %0, %c2_i32_0 : i32
    %c0_i32 = arith.constant 0 : i32
    %c0_i32_1 = arith.constant 0 : i32
    %c0_i32_2 = arith.constant 0 : i32
    return %arg0, %1, %c0_i32, %c0_i32_1 : i32, i32, i32, i32
  }
  func.func @transform_3(%arg0: i32, %arg1: i32) -> (i32, i32, i32) {
    %c0_i32 = arith.constant 0 : i32
    %c0_i32_0 = arith.constant 0 : i32
    %c0_i32_1 = arith.constant 0 : i32
    %c0_i32_2 = arith.constant 0 : i32
    return %c0_i32, %c0_i32_0, %c0_i32_1 : i32, i32, i32
  }
  func.func @transform_4(%arg0: i32, %arg1: i32) -> (i32, i32) {
    %c0_i32 = arith.constant 0 : i32
    %c0_i32_0 = arith.constant 0 : i32
    %c0_i32_1 = arith.constant 0 : i32
    return %c0_i32, %c0_i32_0 : i32, i32
  }
  func.func @transform_5(%arg0: i32, %arg1: i32) -> (i32, i32, i32, i32) {
    %c0_i32 = arith.constant 0 : i32
    %c0_i32_0 = arith.constant 0 : i32
    %c0_i32_1 = arith.constant 0 : i32
    return %arg0, %arg1, %c0_i32, %c0_i32_0 : i32, i32, i32, i32
  }
}

module attributes {stable_mosaic.version = 11 : i64} {
  func.func @_dual_mm_bias_relu_kernel(%arg0: i32, %arg1: memref<128x128xbf16, #tpu.memory_space<vmem>>, %arg2: memref<128x128xbf16, #tpu.memory_space<vmem>>, %arg3: memref<128x16xbf16, #tpu.memory_space<vmem>>, %arg4: memref<16x128xbf16, #tpu.memory_space<vmem>>, %arg5: memref<1x128xf32, #tpu.memory_space<vmem>>, %arg6: memref<128x128xbf16, #tpu.memory_space<vmem>>) attributes {dimension_semantics = [#tpu.dimension_semantics<parallel>], iteration_bounds = array<i64: 1>, scalar_prefetch = 0 : i64, scratch_operands = 0 : i64, tpu.core_type = #tpu.core_type<tc>, window_params = [{transform_indices = @transform_0, window_bounds = array<i64: 128, 128>}, {pipeline_mode = #tpu.pipeline_mode<synchronous>, transform_indices = @transform_1, window_bounds = array<i64: 128, 128>}, {transform_indices = @transform_2, window_bounds = array<i64: 128, 16>}, {pipeline_mode = #tpu.pipeline_mode<synchronous>, transform_indices = @transform_3, window_bounds = array<i64: 16, 128>}, {pipeline_mode = #tpu.pipeline_mode<synchronous>, transform_indices = @transform_4, window_bounds = array<i64: 1, 128>}, {transform_indices = @transform_5, window_bounds = array<i64: 128, 128>}]} {
    %c0 = arith.constant 0 : index
    %c0_0 = arith.constant 0 : index
    %0 = vector.load %arg1[%c0, %c0_0] : memref<128x128xbf16, #tpu.memory_space<vmem>>, vector<128x128xbf16>
    %c0_1 = arith.constant 0 : index
    %c0_2 = arith.constant 0 : index
    %1 = vector.load %arg2[%c0_1, %c0_2] : memref<128x128xbf16, #tpu.memory_space<vmem>>, vector<128x128xbf16>
    %cst = arith.constant dense<0.000000e+00> : vector<128x128xf32>
    %2 = tpu.matmul %0, %1, %cst {dimension_numbers = #tpu.dot_dimension_numbers<[1], [0], [0], [1], [0, 0, 1, 1], [], []>} : vector<128x128xbf16>, vector<128x128xbf16>, vector<128x128xf32> -> vector<128x128xf32>
    %c0_3 = arith.constant 0 : index
    %c0_4 = arith.constant 0 : index
    %3 = vector.load %arg3[%c0_3, %c0_4] : memref<128x16xbf16, #tpu.memory_space<vmem>>, vector<128x16xbf16>
    %c0_5 = arith.constant 0 : index
    %c0_6 = arith.constant 0 : index
    %4 = vector.load %arg4[%c0_5, %c0_6] : memref<16x128xbf16, #tpu.memory_space<vmem>>, vector<16x128xbf16>
    %cst_7 = arith.constant dense<0.000000e+00> : vector<128x128xf32>
    %5 = tpu.matmul %3, %4, %cst_7 {dimension_numbers = #tpu.dot_dimension_numbers<[1], [0], [0], [1], [0, 0, 1, 1], [], []>} : vector<128x16xbf16>, vector<16x128xbf16>, vector<128x128xf32> -> vector<128x128xf32>
    %6 = arith.addf %2, %5 : vector<128x128xf32>
    %c0_8 = arith.constant 0 : index
    %c0_9 = arith.constant 0 : index
    %7 = vector.load %arg5[%c0_8, %c0_9] : memref<1x128xf32, #tpu.memory_space<vmem>>, vector<1x128xf32>
    %8 = vector.broadcast %7 : vector<1x128xf32> to vector<128x128xf32>
    %9 = arith.addf %6, %8 : vector<128x128xf32>
    %cst_10 = arith.constant 0.000000e+00 : f32
    %10 = vector.broadcast %cst_10 : f32 to vector<128x128xf32>
    %11 = arith.maximumf %9, %10 : vector<128x128xf32>
    %12 = arith.truncf %11 : vector<128x128xf32> to vector<128x128xbf16>
    %c0_11 = arith.constant 0 : index
    %c0_12 = arith.constant 0 : index
    %13 = vector.load %arg6[%c0_11, %c0_12] : memref<128x128xbf16, #tpu.memory_space<vmem>>, vector<128x128xbf16>
    tpu.vector_store %arg6[%c0_11, %c0_12], %12 {strides = array<i32>} : memref<128x128xbf16, #tpu.memory_space<vmem>>, vector<128x128xbf16>,
    return
  }
  func.func @transform_0(%arg0: i32) -> (i32, i32) {
    %c0_i32 = arith.constant 0 : i32
    %c0_i32_0 = arith.constant 0 : i32
    return %arg0, %c0_i32 : i32, i32
  }
  func.func @transform_1(%arg0: i32) -> (i32, i32) {
    %c0_i32 = arith.constant 0 : i32
    %c0_i32_0 = arith.constant 0 : i32
    %c0_i32_1 = arith.constant 0 : i32
    return %c0_i32, %c0_i32_0 : i32, i32
  }
  func.func @transform_2(%arg0: i32) -> (i32, i32) {
    %c0_i32 = arith.constant 0 : i32
    %c0_i32_0 = arith.constant 0 : i32
    return %arg0, %c0_i32 : i32, i32
  }
  func.func @transform_3(%arg0: i32) -> (i32, i32) {
    %c0_i32 = arith.constant 0 : i32
    %c0_i32_0 = arith.constant 0 : i32
    %c0_i32_1 = arith.constant 0 : i32
    return %c0_i32, %c0_i32_0 : i32, i32
  }
  func.func @transform_4(%arg0: i32) -> (i32, i32) {
    %c0_i32 = arith.constant 0 : i32
    %c0_i32_0 = arith.constant 0 : i32
    %c0_i32_1 = arith.constant 0 : i32
    return %c0_i32, %c0_i32_0 : i32, i32
  }
  func.func @transform_5(%arg0: i32) -> (i32, i32) {
    %c0_i32 = arith.constant 0 : i32
    %c0_i32_0 = arith.constant 0 : i32
    return %arg0, %c0_i32 : i32, i32
  }
}

</mosaic_0001>

<llo_original>
// kernel: bottleneck_forward.3
$region0: #{bottleneck_forward.3}
  #allocation0 [shape = 'u32[]', space=smem, size = 0x4, offset = 0x4, fixed_abs, tag = 'smem constant byte address 0x4 - core index']
  #allocation1 [shape = 'u32[144,128]{1,0:T(1,128)}', space=vmem, size = 0x12000, scoped, tag = 'internal scratch']
  %s0 = inlined_call_operand.vmem [shape: bf16[512,16], index: 0, kind: input, shape index: {}]
  %s1 = inlined_call_operand.vmem [shape: bf16[16,128], index: 1, kind: input, shape index: {}]
  %s2 = inlined_call_operand.vmem [shape: f32[1,128], index: 2, kind: input, shape index: {}]
  %s3 = inlined_call_operand.vmem [shape: bf16[512,128], index: 3, kind: output, shape index: {}]
  %s4 = sld [smem:[#allocation0]]
  $region22: #{bottleneck_forward.3} parent=0
    _
  %s6 = ssub.s32 1, %s4
  %s7 = scalar_select 0, %s6, %s4
  // Predicated region
  $region2: #{bottleneck_forward.3} parent=0 // pred_check
    _
  $region3: #{bottleneck_forward.3} parent=0 // pred_check_branch
    %9 = sbr.rel (0) target = $region5
  $region4: #{bottleneck_forward.3} parent=0 // pred_region
    _
  $region5: #{bottleneck_forward.3} parent=0 // pred_fallthru
    _
  // Predicated region
  $region6: #{bottleneck_forward.3} parent=0 // pred_check
    _
  $region7: #{bottleneck_forward.3} parent=0 // pred_check_branch
    %11 = sbr.rel (0) target = $region9
  $region8: #{bottleneck_forward.3} parent=0 // pred_region
    _
  $region9: #{bottleneck_forward.3} parent=0 // pred_fallthru
    _
  // Predicated region
  $region10: #{bottleneck_forward.3} parent=0 // pred_check
    _
  $region11: #{bottleneck_forward.3} parent=0 // pred_check_branch
    %13 = sbr.rel (0) target = $region13
  $region12: #{bottleneck_forward.3} parent=0 // pred_region
    _
  $region13: #{bottleneck_forward.3} parent=0 // pred_fallthru
    _
  %v15 = vld [vmem:[%s0] sm:$0xf]
  %v16 = vld [vmem:[%s0 + $0x4] sm:$0xf]
  %v17 = vld [vmem:[%s0 + $0x8] sm:$0xf]
  %v18 = vld [vmem:[%s0 + $0xc] sm:$0xf]
  %v19 = vld [vmem:[%s0 + $0x10] sm:$0xf]
  %v20 = vld [vmem:[%s0 + $0x14] sm:$0xf]
  %v21 = vld [vmem:[%s0 + $0x18] sm:$0xf]
  %v22 = vld [vmem:[%s0 + $0x1c] sm:$0xf]
  %v23 = vld [vmem:[%s0 + $0x20] sm:$0xf]
  %v24 = vld [vmem:[%s0 + $0x24] sm:$0xf]
  %v25 = vld [vmem:[%s0 + $0x28] sm:$0xf]
  %v26 = vld [vmem:[%s0 + $0x2c] sm:$0xf]
  %v27 = vld [vmem:[%s0 + $0x30] sm:$0xf]
  %v28 = vld [vmem:[%s0 + $0x34] sm:$0xf]
  %v29 = vld [vmem:[%s0 + $0x38] sm:$0xf]
  %v30 = vld [vmem:[%s0 + $0x3c] sm:$0xf]
  %v31 = vld [vmem:[%s0 + $0x40] sm:$0xf]
  %v32 = vld [vmem:[%s0 + $0x44] sm:$0xf]
  %v33 = vld [vmem:[%s0 + $0x48] sm:$0xf]
  %v34 = vld [vmem:[%s0 + $0x4c] sm:$0xf]
  %v35 = vld [vmem:[%s0 + $0x50] sm:$0xf]
  %v36 = vld [vmem:[%s0 + $0x54] sm:$0xf]
  %v37 = vld [vmem:[%s0 + $0x58] sm:$0xf]
  %v38 = vld [vmem:[%s0 + $0x5c] sm:$0xf]
  %v39 = vld [vmem:[%s0 + $0x60] sm:$0xf]
  %v40 = vld [vmem:[%s0 + $0x64] sm:$0xf]
  %v41 = vld [vmem:[%s0 + $0x68] sm:$0xf]
  %v42 = vld [vmem:[%s0 + $0x6c] sm:$0xf]
  %v43 = vld [vmem:[%s0 + $0x70] sm:$0xf]
  %v44 = vld [vmem:[%s0 + $0x74] sm:$0xf]
  %v45 = vld [vmem:[%s0 + $0x78] sm:$0xf]
  %v46 = vld [vmem:[%s0 + $0x7c] sm:$0xf]
  %v47 = vld [vmem:[%s0 + $0x80] sm:$0xf]
  %v48 = vld [vmem:[%s0 + $0x84] sm:$0xf]
  %v49 = vld [vmem:[%s0 + $0x88] sm:$0xf]
  %v50 = vld [vmem:[%s0 + $0x8c] sm:$0xf]
  %v51 = vld [vmem:[%s0 + $0x90] sm:$0xf]
  %v52 = vld [vmem:[%s0 + $0x94] sm:$0xf]
  %v53 = vld [vmem:[%s0 + $0x98] sm:$0xf]
  %v54 = vld [vmem:[%s0 + $0x9c] sm:$0xf]
  %v55 = vld [vmem:[%s0 + $0xa0] sm:$0xf]
  %v56 = vld [vmem:[%s0 + $0xa4] sm:$0xf]
  %v57 = vld [vmem:[%s0 + $0xa8] sm:$0xf]
  %v58 = vld [vmem:[%s0 + $0xac] sm:$0xf]
  %v59 = vld [vmem:[%s0 + $0xb0] sm:$0xf]
  %v60 = vld [vmem:[%s0 + $0xb4] sm:$0xf]
  %v61 = vld [vmem:[%s0 + $0xb8] sm:$0xf]
  %v62 = vld [vmem:[%s0 + $0xbc] sm:$0xf]
  %v63 = vld [vmem:[%s0 + $0xc0] sm:$0xf]
  %v64 = vld [vmem:[%s0 + $0xc4] sm:$0xf]
  %v65 = vld [vmem:[%s0 + $0xc8] sm:$0xf]
  %v66 = vld [vmem:[%s0 + $0xcc] sm:$0xf]
  %v67 = vld [vmem:[%s0 + $0xd0] sm:$0xf]
  %v68 = vld [vmem:[%s0 + $0xd4] sm:$0xf]
  %v69 = vld [vmem:[%s0 + $0xd8] sm:$0xf]
  %v70 = vld [vmem:[%s0 + $0xdc] sm:$0xf]
  %v71 = vld [vmem:[%s0 + $0xe0] sm:$0xf]
  %v72 = vld [vmem:[%s0 + $0xe4] sm:$0xf]
  %v73 = vld [vmem:[%s0 + $0xe8] sm:$0xf]
  %v74 = vld [vmem:[%s0 + $0xec] sm:$0xf]
  %v75 = vld [vmem:[%s0 + $0xf0] sm:$0xf]
  %v76 = vld [vmem:[%s0 + $0xf4] sm:$0xf]
  %v77 = vld [vmem:[%s0 + $0xf8] sm:$0xf]
  %v78 = vld [vmem:[%s0 + $0xfc] sm:$0xf]
  %v79 = vld [vmem:[%s1] sm:$0xf]
  %v80 = vld [vmem:[%s1 + $0x4] sm:$0xf]
  %v81 = vld [vmem:[%s2] sm:$0x1]
  %v83 = vlaneseq
  %v84 = vshrl.u32 %v83, 7
  %v85 = vsub.s32 0, %v84
  %v86 = vrot.slane %v81, %v85
  %v152 = vunpack.c.l.b16 %v15
  %v153 = vunpack.c.l.b16 %v16
  %v154 = vunpack.c.l.b16 %v17
  %v155 = vunpack.c.l.b16 %v18
  %v156 = vunpack.c.l.b16 %v19
  %v157 = vunpack.c.l.b16 %v20
  %v158 = vunpack.c.l.b16 %v21
  %v159 = vunpack.c.l.b16 %v22
  %v160 = vunpack.c.l.b16 %v23
  %v161 = vunpack.c.l.b16 %v24
  %v162 = vunpack.c.l.b16 %v25
  %v163 = vunpack.c.l.b16 %v26
  %v164 = vunpack.c.l.b16 %v27
  %v165 = vunpack.c.l.b16 %v28
  %v166 = vunpack.c.l.b16 %v29
  %v167 = vunpack.c.l.b16 %v30
  %v168 = vunpack.c.l.b16 %v31
  %v169 = vunpack.c.l.b16 %v32
  %v170 = vunpack.c.l.b16 %v33
  %v171 = vunpack.c.l.b16 %v34
  %v172 = vunpack.c.l.b16 %v35
  %v173 = vunpack.c.l.b16 %v36
  %v174 = vunpack.c.l.b16 %v37
  %v175 = vunpack.c.l.b16 %v38
  %v176 = vunpack.c.l.b16 %v39
  %v177 = vunpack.c.l.b16 %v40
  %v178 = vunpack.c.l.b16 %v41
  %v179 = vunpack.c.l.b16 %v42
  %v180 = vunpack.c.l.b16 %v43
  %v181 = vunpack.c.l.b16 %v44
  %v182 = vunpack.c.l.b16 %v45
  %v183 = vunpack.c.l.b16 %v46
  %v184 = vunpack.c.l.b16 %v47
  %v185 = vunpack.c.l.b16 %v48
  %v186 = vunpack.c.l.b16 %v49
  %v187 = vunpack.c.l.b16 %v50
  %v188 = vunpack.c.l.b16 %v51
  %v189 = vunpack.c.l.b16 %v52
  %v190 = vunpack.c.l.b16 %v53
  %v191 = vunpack.c.l.b16 %v54
  %v192 = vunpack.c.l.b16 %v55
  %v193 = vunpack.c.l.b16 %v56
  %v194 = vunpack.c.l.b16 %v57
  %v195 = vunpack.c.l.b16 %v58
  %v196 = vunpack.c.l.b16 %v59
  %v197 = vunpack.c.l.b16 %v60
  %v198 = vunpack.c.l.b16 %v61
  %v199 = vunpack.c.l.b16 %v62
  %v200 = vunpack.c.l.b16 %v63
  %v201 = vunpack.c.l.b16 %v64
  %v202 = vunpack.c.l.b16 %v65
  %v203 = vunpack.c.l.b16 %v66
  %v204 = vunpack.c.l.b16 %v67
  %v205 = vunpack.c.l.b16 %v68
  %v206 = vunpack.c.l.b16 %v69
  %v207 = vunpack.c.l.b16 %v70
  %v208 = vunpack.c.l.b16 %v71
  %v209 = vunpack.c.l.b16 %v72
  %v210 = vunpack.c.l.b16 %v73
  %v211 = vunpack.c.l.b16 %v74
  %v212 = vunpack.c.l.b16 %v75
  %v213 = vunpack.c.l.b16 %v76
  %v214 = vunpack.c.l.b16 %v77
  %v215 = vunpack.c.l.b16 %v78
  %v216 = vpack.c.b16 %v153, %v152
  %v217 = vpack.c.b16 %v155, %v154
  %v218 = vpack.c.b16 %v157, %v156
  %v219 = vpack.c.b16 %v159, %v158
  %v220 = vpack.c.b16 %v161, %v160
  %v221 = vpack.c.b16 %v163, %v162
  %v222 = vpack.c.b16 %v165, %v164
  %v223 = vpack.c.b16 %v167, %v166
  %v224 = vpack.c.b16 %v169, %v168
  %v225 = vpack.c.b16 %v171, %v170
  %v226 = vpack.c.b16 %v173, %v172
  %v227 = vpack.c.b16 %v175, %v174
  %v228 = vpack.c.b16 %v177, %v176
  %v229 = vpack.c.b16 %v179, %v178
  %v230 = vpack.c.b16 %v181, %v180
  %v231 = vpack.c.b16 %v183, %v182
  %v232 = vpack.c.b16 %v185, %v184
  %v233 = vpack.c.b16 %v187, %v186
  %v234 = vpack.c.b16 %v189, %v188
  %v235 = vpack.c.b16 %v191, %v190
  %v236 = vpack.c.b16 %v193, %v192
  %v237 = vpack.c.b16 %v195, %v194
  %v238 = vpack.c.b16 %v197, %v196
  %v239 = vpack.c.b16 %v199, %v198
  %v240 = vpack.c.b16 %v201, %v200
  %v241 = vpack.c.b16 %v203, %v202
  %v242 = vpack.c.b16 %v205, %v204
  %v243 = vpack.c.b16 %v207, %v206
  %v244 = vpack.c.b16 %v209, %v208
  %v245 = vpack.c.b16 %v211, %v210
  %v246 = vpack.c.b16 %v213, %v212
  %v247 = vpack.c.b16 %v215, %v214
  %v250 = vunpack.c.l.b16 %v79
  %v251 = vunpack.c.l.b16 %v80
  %v252 = vpack.c.b16 %v251, %v250
  %vm254 = vcmask 130048
  %v256 = vsel %vm254, %v216, 0
  %v259 = vsel %vm254, %v217, 0
  %v262 = vsel %vm254, %v218, 0
  %v265 = vsel %vm254, %v219, 0
  %v268 = vsel %vm254, %v220, 0
  %v271 = vsel %vm254, %v221, 0
  %v274 = vsel %vm254, %v222, 0
  %v277 = vsel %vm254, %v223, 0
  %v280 = vsel %vm254, %v224, 0
  %v283 = vsel %vm254, %v225, 0
  %v286 = vsel %vm254, %v226, 0
  %v289 = vsel %vm254, %v227, 0
  %v292 = vsel %vm254, %v228, 0
  %v295 = vsel %vm254, %v229, 0
  %v298 = vsel %vm254, %v230, 0
  %v301 = vsel %vm254, %v231, 0
  %v304 = vsel %vm254, %v232, 0
  %v307 = vsel %vm254, %v233, 0
  %v310 = vsel %vm254, %v234, 0
  %v313 = vsel %vm254, %v235, 0
  %v316 = vsel %vm254, %v236, 0
  %v319 = vsel %vm254, %v237, 0
  %v322 = vsel %vm254, %v238, 0
  %v325 = vsel %vm254, %v239, 0
  %v328 = vsel %vm254, %v240, 0
  %v331 = vsel %vm254, %v241, 0
  %v334 = vsel %vm254, %v242, 0
  %v337 = vsel %vm254, %v243, 0
  %v340 = vsel %vm254, %v244, 0
  %v343 = vsel %vm254, %v245, 0
  %v346 = vsel %vm254, %v246, 0
  %v349 = vsel %vm254, %v247, 0
  %351 = vmatprep.subr.bf16.mxu0 0
  %352 = vmatpush1.bf16.msra.mxu0 0
  %353 = vmatprep.subr.bf16.mxu0 0
  %354 = vmatpush1.bf16.msra.mxu0 0
  %355 = vmatprep.subr.bf16.mxu0 0
  %356 = vmatpush1.bf16.msra.mxu0 0
  %357 = vmatprep.subr.bf16.mxu0 0
  %358 = vmatpush1.bf16.msra.mxu0 0
  %359 = vmatprep.subr.bf16.mxu0 0
  %360 = vmatpush1.bf16.msra.mxu0 0
  %361 = vmatprep.subr.bf16.mxu0 0
  %362 = vmatpush1.bf16.msra.mxu0 0
  %363 = vmatprep.subr.bf16.mxu0 0
  %364 = vmatpush1.bf16.msra.mxu0 0
  %365 = vmatprep.subr.bf16.mxu0 0
  %366 = vmatpush1.bf16.msra.mxu0 %v252
  %367 = vmatprep.subr.bf16.mxu0 0
  %368 = vmatpush2.bf16.msra.mxu0 0
  %369 = vmatprep.subr.bf16.mxu0 0
  %370 = vmatpush2.bf16.msra.mxu0 0
  %371 = vmatprep.subr.bf16.mxu0 0
  %372 = vmatpush2.bf16.msra.mxu0 0
  %373 = vmatprep.subr.bf16.mxu0 0
  %374 = vmatpush2.bf16.msra.mxu0 0
  %375 = vmatprep.subr.bf16.mxu0 0
  %376 = vmatpush2.bf16.msra.mxu0 0
  %377 = vmatprep.subr.bf16.mxu0 0
  %378 = vmatpush2.bf16.msra.mxu0 0
  %379 = vmatprep.subr.bf16.mxu0 0
  %380 = vmatpush2.bf16.msra.mxu0 0
  %381 = vmatprep.subr.bf16.mxu0 0
  %382 = vmatpush2.bf16.msra.mxu0 0
  %383 = vmatprep.mubr.bf16.mxu0 0
  %384 = vmatmul.mubr.bf16.gmra.mxu0 %v256
  %v385 = vpop.f32.mrf.mxu0
  %v386 = vadd.f32 %v86, %v385
  %v387 = vpop.f32.mrf.mxu0
  %v388 = vpop.f32.mrf.mxu0
  %v389 = vadd.f32 %v86, %v388
  %v390 = vpop.f32.mrf.mxu0
  %391 = vmatprep.mubr.bf16.mxu0 0
  %392 = vmatmul.mubr.bf16.gmra.mxu0 %v259
  %v393 = vpop.f32.mrf.mxu0
  %v394 = vadd.f32 %v86, %v393
  %v395 = vpop.f32.mrf.mxu0
  %v396 = vpop.f32.mrf.mxu0
  %v397 = vadd.f32 %v86, %v396
  %v398 = vpop.f32.mrf.mxu0
  %399 = vmatprep.mubr.bf16.mxu0 0
  %400 = vmatmul.mubr.bf16.gmra.mxu0 %v262
  %v401 = vpop.f32.mrf.mxu0
  %v402 = vadd.f32 %v86, %v401
  %v403 = vpop.f32.mrf.mxu0
  %v404 = vpop.f32.mrf.mxu0
  %v405 = vadd.f32 %v86, %v404
  %v406 = vpop.f32.mrf.mxu0
  %407 = vmatprep.mubr.bf16.mxu0 0
  %408 = vmatmul.mubr.bf16.gmra.mxu0 %v265
  %v409 = vpop.f32.mrf.mxu0
  %v410 = vadd.f32 %v86, %v409
  %v411 = vpop.f32.mrf.mxu0
  %v412 = vpop.f32.mrf.mxu0
  %v413 = vadd.f32 %v86, %v412
  %v414 = vpop.f32.mrf.mxu0
  %415 = vmatprep.mubr.bf16.mxu0 0
  %416 = vmatmul.mubr.bf16.gmra.mxu0 %v268
  %v417 = vpop.f32.mrf.mxu0
  %v418 = vadd.f32 %v86, %v417
  %v419 = vpop.f32.mrf.mxu0
  %v420 = vpop.f32.mrf.mxu0
  %v421 = vadd.f32 %v86, %v420
  %v422 = vpop.f32.mrf.mxu0
  %423 = vmatprep.mubr.bf16.mxu0 0
  %424 = vmatmul.mubr.bf16.gmra.mxu0 %v271
  %v425 = vpop.f32.mrf.mxu0
  %v426 = vadd.f32 %v86, %v425
  %v427 = vpop.f32.mrf.mxu0
  %v428 = vpop.f32.mrf.mxu0
  %v429 = vadd.f32 %v86, %v428
  %v430 = vpop.f32.mrf.mxu0
  %431 = vmatprep.mubr.bf16.mxu0 0
  %432 = vmatmul.mubr.bf16.gmra.mxu0 %v274
  %v433 = vpop.f32.mrf.mxu0
  %v434 = vadd.f32 %v86, %v433
  %v435 = vpop.f32.mrf.mxu0
  %v436 = vpop.f32.mrf.mxu0
  %v437 = vadd.f32 %v86, %v436
  %v438 = vpop.f32.mrf.mxu0
  %439 = vmatprep.mubr.bf16.mxu0 0
  %440 = vmatmul.mubr.bf16.gmra.mxu0 %v277
  %v441 = vpop.f32.mrf.mxu0
  %v442 = vadd.f32 %v86, %v441
  %v443 = vpop.f32.mrf.mxu0
  %v444 = vpop.f32.mrf.mxu0
  %v445 = vadd.f32 %v86, %v444
  %v446 = vpop.f32.mrf.mxu0
  %447 = vmatprep.mubr.bf16.mxu0 0
  %448 = vmatmul.mubr.bf16.gmra.mxu0 %v280
  %v449 = vpop.f32.mrf.mxu0
  %v450 = vadd.f32 %v86, %v449
  %v451 = vpop.f32.mrf.mxu0
  %v452 = vpop.f32.mrf.mxu0
  %v453 = vadd.f32 %v86, %v452
  %v454 = vpop.f32.mrf.mxu0
  %455 = vmatprep.mubr.bf16.mxu0 0
  %456 = vmatmul.mubr.bf16.gmra.mxu0 %v283
  %v457 = vpop.f32.mrf.mxu0
  %v458 = vadd.f32 %v86, %v457
  %v459 = vpop.f32.mrf.mxu0
  %v460 = vpop.f32.mrf.mxu0
  %v461 = vadd.f32 %v86, %v460
  %v462 = vpop.f32.mrf.mxu0
  %463 = vmatprep.mubr.bf16.mxu0 0
  %464 = vmatmul.mubr.bf16.gmra.mxu0 %v286
  %v465 = vpop.f32.mrf.mxu0
  %v466 = vadd.f32 %v86, %v465
  %v467 = vpop.f32.mrf.mxu0
  %v468 = vpop.f32.mrf.mxu0
  %v469 = vadd.f32 %v86, %v468
  %v470 = vpop.f32.mrf.mxu0
  %471 = vmatprep.mubr.bf16.mxu0 0
  %472 = vmatmul.mubr.bf16.gmra.mxu0 %v289
  %v473 = vpop.f32.mrf.mxu0
  %v474 = vadd.f32 %v86, %v473
  %v475 = vpop.f32.mrf.mxu0
  %v476 = vpop.f32.mrf.mxu0
  %v477 = vadd.f32 %v86, %v476
  %v478 = vpop.f32.mrf.mxu0
  %479 = vmatprep.mubr.bf16.mxu0 0
  %480 = vmatmul.mubr.bf16.gmra.mxu0 %v292
  %v481 = vpop.f32.mrf.mxu0
  %v482 = vadd.f32 %v86, %v481
  %v483 = vpop.f32.mrf.mxu0
  %v484 = vpop.f32.mrf.mxu0
  %v485 = vadd.f32 %v86, %v484
  %v486 = vpop.f32.mrf.mxu0
  %487 = vmatprep.mubr.bf16.mxu0 0
  %488 = vmatmul.mubr.bf16.gmra.mxu0 %v295
  %v489 = vpop.f32.mrf.mxu0
  %v490 = vadd.f32 %v86, %v489
  %v491 = vpop.f32.mrf.mxu0
  %v492 = vpop.f32.mrf.mxu0
  %v493 = vadd.f32 %v86, %v492
  %v494 = vpop.f32.mrf.mxu0
  %495 = vmatprep.mubr.bf16.mxu0 0
  %496 = vmatmul.mubr.bf16.gmra.mxu0 %v298
  %v497 = vpop.f32.mrf.mxu0
  %v498 = vadd.f32 %v86, %v497
  %v499 = vpop.f32.mrf.mxu0
  %v500 = vpop.f32.mrf.mxu0
  %v501 = vadd.f32 %v86, %v500
  %v502 = vpop.f32.mrf.mxu0
  %503 = vmatprep.mubr.bf16.mxu0 0
  %504 = vmatmul.mubr.bf16.gmra.mxu0 %v301
  %v505 = vpop.f32.mrf.mxu0
  %v506 = vadd.f32 %v86, %v505
  %v507 = vpop.f32.mrf.mxu0
  %v508 = vpop.f32.mrf.mxu0
  %v509 = vadd.f32 %v86, %v508
  %v510 = vpop.f32.mrf.mxu0
  %511 = vmatprep.mubr.bf16.mxu0 0
  %512 = vmatmul.mubr.bf16.gmra.mxu0 %v304
  %v513 = vpop.f32.mrf.mxu0
  %v514 = vadd.f32 %v86, %v513
  %v515 = vpop.f32.mrf.mxu0
  %v516 = vpop.f32.mrf.mxu0
  %v517 = vadd.f32 %v86, %v516
  %v518 = vpop.f32.mrf.mxu0
  %519 = vmatprep.mubr.bf16.mxu0 0
  %520 = vmatmul.mubr.bf16.gmra.mxu0 %v307
  %v521 = vpop.f32.mrf.mxu0
  %v522 = vadd.f32 %v86, %v521
  %v523 = vpop.f32.mrf.mxu0
  %v524 = vpop.f32.mrf.mxu0
  %v525 = vadd.f32 %v86, %v524
  %v526 = vpop.f32.mrf.mxu0
  %527 = vmatprep.mubr.bf16.mxu0 0
  %528 = vmatmul.mubr.bf16.gmra.mxu0 %v310
  %v529 = vpop.f32.mrf.mxu0
  %v530 = vadd.f32 %v86, %v529
  %v531 = vpop.f32.mrf.mxu0
  %v532 = vpop.f32.mrf.mxu0
  %v533 = vadd.f32 %v86, %v532
  %v534 = vpop.f32.mrf.mxu0
  %535 = vmatprep.mubr.bf16.mxu0 0
  %536 = vmatmul.mubr.bf16.gmra.mxu0 %v313
  %v537 = vpop.f32.mrf.mxu0
  %v538 = vadd.f32 %v86, %v537
  %v539 = vpop.f32.mrf.mxu0
  %v540 = vpop.f32.mrf.mxu0
  %v541 = vadd.f32 %v86, %v540
  %v542 = vpop.f32.mrf.mxu0
  %543 = vmatprep.mubr.bf16.mxu0 0
  %544 = vmatmul.mubr.bf16.gmra.mxu0 %v316
  %v545 = vpop.f32.mrf.mxu0
  %v546 = vadd.f32 %v86, %v545
  %v547 = vpop.f32.mrf.mxu0
  %v548 = vpop.f32.mrf.mxu0
  %v549 = vadd.f32 %v86, %v548
  %v550 = vpop.f32.mrf.mxu0
  %551 = vmatprep.mubr.bf16.mxu0 0
  %552 = vmatmul.mubr.bf16.gmra.mxu0 %v319
  %v553 = vpop.f32.mrf.mxu0
  %v554 = vadd.f32 %v86, %v553
  %v555 = vpop.f32.mrf.mxu0
  %v556 = vpop.f32.mrf.mxu0
  %v557 = vadd.f32 %v86, %v556
  %v558 = vpop.f32.mrf.mxu0
  %559 = vmatprep.mubr.bf16.mxu0 0
  %560 = vmatmul.mubr.bf16.gmra.mxu0 %v322
  %v561 = vpop.f32.mrf.mxu0
  %v562 = vadd.f32 %v86, %v561
  %v563 = vpop.f32.mrf.mxu0
  %v564 = vpop.f32.mrf.mxu0
  %v565 = vadd.f32 %v86, %v564
  %v566 = vpop.f32.mrf.mxu0
  %567 = vmatprep.mubr.bf16.mxu0 0
  %568 = vmatmul.mubr.bf16.gmra.mxu0 %v325
  %v569 = vpop.f32.mrf.mxu0
  %v570 = vadd.f32 %v86, %v569
  %v571 = vpop.f32.mrf.mxu0
  %v572 = vpop.f32.mrf.mxu0
  %v573 = vadd.f32 %v86, %v572
  %v574 = vpop.f32.mrf.mxu0
  %575 = vmatprep.mubr.bf16.mxu0 0
  %576 = vmatmul.mubr.bf16.gmra.mxu0 %v328
  %v577 = vpop.f32.mrf.mxu0
  %v578 = vadd.f32 %v86, %v577
  %v579 = vpop.f32.mrf.mxu0
  %v580 = vpop.f32.mrf.mxu0
  %v581 = vadd.f32 %v86, %v580
  %v582 = vpop.f32.mrf.mxu0
  %583 = vmatprep.mubr.bf16.mxu0 0
  %584 = vmatmul.mubr.bf16.gmra.mxu0 %v331
  %v585 = vpop.f32.mrf.mxu0
  %v586 = vadd.f32 %v86, %v585
  %v587 = vpop.f32.mrf.mxu0
  %v588 = vpop.f32.mrf.mxu0
  %v589 = vadd.f32 %v86, %v588
  %v590 = vpop.f32.mrf.mxu0
  %591 = vmatprep.mubr.bf16.mxu0 0
  %592 = vmatmul.mubr.bf16.gmra.mxu0 %v334
  %v593 = vpop.f32.mrf.mxu0
  %v594 = vadd.f32 %v86, %v593
  %v595 = vpop.f32.mrf.mxu0
  %v596 = vpop.f32.mrf.mxu0
  %v597 = vadd.f32 %v86, %v596
  %v598 = vpop.f32.mrf.mxu0
  %599 = vmatprep.mubr.bf16.mxu0 0
  %600 = vmatmul.mubr.bf16.gmra.mxu0 %v337
  %v601 = vpop.f32.mrf.mxu0
  %v602 = vadd.f32 %v86, %v601
  %v603 = vpop.f32.mrf.mxu0
  %v604 = vpop.f32.mrf.mxu0
  %v605 = vadd.f32 %v86, %v604
  %v606 = vpop.f32.mrf.mxu0
  %607 = vmatprep.mubr.bf16.mxu0 0
  %608 = vmatmul.mubr.bf16.gmra.mxu0 %v340
  %v609 = vpop.f32.mrf.mxu0
  %v610 = vadd.f32 %v86, %v609
  %v611 = vpop.f32.mrf.mxu0
  %v612 = vpop.f32.mrf.mxu0
  %v613 = vadd.f32 %v86, %v612
  %v614 = vpop.f32.mrf.mxu0
  %615 = vmatprep.mubr.bf16.mxu0 0
  %616 = vmatmul.mubr.bf16.gmra.mxu0 %v343
  %v617 = vpop.f32.mrf.mxu0
  %v618 = vadd.f32 %v86, %v617
  %v619 = vpop.f32.mrf.mxu0
  %v620 = vpop.f32.mrf.mxu0
  %v621 = vadd.f32 %v86, %v620
  %v622 = vpop.f32.mrf.mxu0
  %623 = vmatprep.mubr.bf16.mxu0 0
  %624 = vmatmul.mubr.bf16.gmra.mxu0 %v346
  %v625 = vpop.f32.mrf.mxu0
  %v626 = vadd.f32 %v86, %v625
  %v627 = vpop.f32.mrf.mxu0
  %v628 = vpop.f32.mrf.mxu0
  %v629 = vadd.f32 %v86, %v628
  %v630 = vpop.f32.mrf.mxu0
  %631 = vmatprep.mubr.bf16.mxu0 0
  %632 = vmatmul.mubr.bf16.gmra.mxu0 %v349
  %v633 = vpop.f32.mrf.mxu0
  %v634 = vadd.f32 %v86, %v633
  %v635 = vpop.f32.mrf.mxu0
  %v636 = vpop.f32.mrf.mxu0
  %v637 = vadd.f32 %v86, %v636
  %v638 = vpop.f32.mrf.mxu0
  %639 = vdwg.mxu0
  %v640 = vmax.f32 %v386, 0.0
  %v641 = vmax.f32 %v389, 0.0
  %v642 = vmax.f32 %v394, 0.0
  %v643 = vmax.f32 %v397, 0.0
  %v644 = vmax.f32 %v402, 0.0
  %v645 = vmax.f32 %v405, 0.0
  %v646 = vmax.f32 %v410, 0.0
  %v647 = vmax.f32 %v413, 0.0
  %v648 = vmax.f32 %v418, 0.0
  %v649 = vmax.f32 %v421, 0.0
  %v650 = vmax.f32 %v426, 0.0
  %v651 = vmax.f32 %v429, 0.0
  %v652 = vmax.f32 %v434, 0.0
  %v653 = vmax.f32 %v437, 0.0
  %v654 = vmax.f32 %v442, 0.0
  %v655 = vmax.f32 %v445, 0.0
  %v656 = vmax.f32 %v450, 0.0
  %v657 = vmax.f32 %v453, 0.0
  %v658 = vmax.f32 %v458, 0.0
  %v659 = vmax.f32 %v461, 0.0
  %v660 = vmax.f32 %v466, 0.0
  %v661 = vmax.f32 %v469, 0.0
  %v662 = vmax.f32 %v474, 0.0
  %v663 = vmax.f32 %v477, 0.0
  %v664 = vmax.f32 %v482, 0.0
  %v665 = vmax.f32 %v485, 0.0
  %v666 = vmax.f32 %v490, 0.0
  %v667 = vmax.f32 %v493, 0.0
  %v668 = vmax.f32 %v498, 0.0
  %v669 = vmax.f32 %v501, 0.0
  %v670 = vmax.f32 %v506, 0.0
  %v671 = vmax.f32 %v509, 0.0
  %v672 = vmax.f32 %v514, 0.0
  %v673 = vmax.f32 %v517, 0.0
  %v674 = vmax.f32 %v522, 0.0
  %v675 = vmax.f32 %v525, 0.0
  %v676 = vmax.f32 %v530, 0.0
  %v677 = vmax.f32 %v533, 0.0
  %v678 = vmax.f32 %v538, 0.0
  %v679 = vmax.f32 %v541, 0.0
  %v680 = vmax.f32 %v546, 0.0
  %v681 = vmax.f32 %v549, 0.0
  %v682 = vmax.f32 %v554, 0.0
  %v683 = vmax.f32 %v557, 0.0
  %v684 = vmax.f32 %v562, 0.0
  %v685 = vmax.f32 %v565, 0.0
  %v686 = vmax.f32 %v570, 0.0
  %v687 = vmax.f32 %v573, 0.0
  %v688 = vmax.f32 %v578, 0.0
  %v689 = vmax.f32 %v581, 0.0
  %v690 = vmax.f32 %v586, 0.0
  %v691 = vmax.f32 %v589, 0.0
  %v692 = vmax.f32 %v594, 0.0
  %v693 = vmax.f32 %v597, 0.0
  %v694 = vmax.f32 %v602, 0.0
  %v695 = vmax.f32 %v605, 0.0
  %v696 = vmax.f32 %v610, 0.0
  %v697 = vmax.f32 %v613, 0.0
  %v698 = vmax.f32 %v618, 0.0
  %v699 = vmax.f32 %v621, 0.0
  %v700 = vmax.f32 %v626, 0.0
  %v701 = vmax.f32 %v629, 0.0
  %v702 = vmax.f32 %v634, 0.0
  %v703 = vmax.f32 %v637, 0.0
  %v704 = vpack.c.bf16 %v641, %v640
  %v705 = vpack.c.bf16 %v643, %v642
  %v706 = vpack.c.bf16 %v645, %v644
  %v707 = vpack.c.bf16 %v647, %v646
  %v708 = vpack.c.bf16 %v649, %v648
  %v709 = vpack.c.bf16 %v651, %v650
  %v710 = vpack.c.bf16 %v653, %v652
  %v711 = vpack.c.bf16 %v655, %v654
  %v712 = vpack.c.bf16 %v657, %v656
  %v713 = vpack.c.bf16 %v659, %v658
  %v714 = vpack.c.bf16 %v661, %v660
  %v715 = vpack.c.bf16 %v663, %v662
  %v716 = vpack.c.bf16 %v665, %v664
  %v717 = vpack.c.bf16 %v667, %v666
  %v718 = vpack.c.bf16 %v669, %v668
  %v719 = vpack.c.bf16 %v671, %v670
  %v720 = vpack.c.bf16 %v673, %v672
  %v721 = vpack.c.bf16 %v675, %v674
  %v722 = vpack.c.bf16 %v677, %v676
  %v723 = vpack.c.bf16 %v679, %v678
  %v724 = vpack.c.bf16 %v681, %v680
  %v725 = vpack.c.bf16 %v683, %v682
  %v726 = vpack.c.bf16 %v685, %v684
  %v727 = vpack.c.bf16 %v687, %v686
  %v728 = vpack.c.bf16 %v689, %v688
  %v729 = vpack.c.bf16 %v691, %v690
  %v730 = vpack.c.bf16 %v693, %v692
  %v731 = vpack.c.bf16 %v695, %v694
  %v732 = vpack.c.bf16 %v697, %v696
  %v733 = vpack.c.bf16 %v699, %v698
  %v734 = vpack.c.bf16 %v701, %v700
  %v735 = vpack.c.bf16 %v703, %v702
  %v768 = vunpack.c.l.b16 %v704
  %v769 = vunpack.c.h.b16 %v704
  %v770 = vunpack.c.l.b16 %v705
  %v771 = vunpack.c.h.b16 %v705
  %v772 = vunpack.c.l.b16 %v706
  %v773 = vunpack.c.h.b16 %v706
  %v774 = vunpack.c.l.b16 %v707
  %v775 = vunpack.c.h.b16 %v707
  %v776 = vunpack.c.l.b16 %v708
  %v777 = vunpack.c.h.b16 %v708
  %v778 = vunpack.c.l.b16 %v709
  %v779 = vunpack.c.h.b16 %v709
  %v780 = vunpack.c.l.b16 %v710
  %v781 = vunpack.c.h.b16 %v710
  %v782 = vunpack.c.l.b16 %v711
  %v783 = vunpack.c.h.b16 %v711
  %v784 = vunpack.c.l.b16 %v712
  %v785 = vunpack.c.h.b16 %v712
  %v786 = vunpack.c.l.b16 %v713
  %v787 = vunpack.c.h.b16 %v713
  %v788 = vunpack.c.l.b16 %v714
  %v789 = vunpack.c.h.b16 %v714
  %v790 = vunpack.c.l.b16 %v715
  %v791 = vunpack.c.h.b16 %v715
  %v792 = vunpack.c.l.b16 %v716
  %v793 = vunpack.c.h.b16 %v716
  %v794 = vunpack.c.l.b16 %v717
  %v795 = vunpack.c.h.b16 %v717
  %v796 = vunpack.c.l.b16 %v718
  %v797 = vunpack.c.h.b16 %v718
  %v798 = vunpack.c.l.b16 %v719
  %v799 = vunpack.c.h.b16 %v719
  %v800 = vunpack.c.l.b16 %v720
  %v801 = vunpack.c.h.b16 %v720
  %v802 = vunpack.c.l.b16 %v721
  %v803 = vunpack.c.h.b16 %v721
  %v804 = vunpack.c.l.b16 %v722
  %v805 = vunpack.c.h.b16 %v722
  %v806 = vunpack.c.l.b16 %v723
  %v807 = vunpack.c.h.b16 %v723
  %v808 = vunpack.c.l.b16 %v724
  %v809 = vunpack.c.h.b16 %v724
  %v810 = vunpack.c.l.b16 %v725
  %v811 = vunpack.c.h.b16 %v725
  %v812 = vunpack.c.l.b16 %v726
  %v813 = vunpack.c.h.b16 %v726
  %v814 = vunpack.c.l.b16 %v727
  %v815 = vunpack.c.h.b16 %v727
  %v816 = vunpack.c.l.b16 %v728
  %v817 = vunpack.c.h.b16 %v728
  %v818 = vunpack.c.l.b16 %v729
  %v819 = vunpack.c.h.b16 %v729
  %v820 = vunpack.c.l.b16 %v730
  %v821 = vunpack.c.h.b16 %v730
  %v822 = vunpack.c.l.b16 %v731
  %v823 = vunpack.c.h.b16 %v731
  %v824 = vunpack.c.l.b16 %v732
  %v825 = vunpack.c.h.b16 %v732
  %v826 = vunpack.c.l.b16 %v733
  %v827 = vunpack.c.h.b16 %v733
  %v828 = vunpack.c.l.b16 %v734
  %v829 = vunpack.c.h.b16 %v734
  %v830 = vunpack.c.l.b16 %v735
  %v831 = vunpack.c.h.b16 %v735
  %v832 = vpack.c.b16 %v768, %v768
  %v833 = vpack.c.b16 %v769, %v769
  %v834 = vpack.c.b16 %v770, %v770
  %v835 = vpack.c.b16 %v771, %v771
  %v836 = vpack.c.b16 %v772, %v772
  %v837 = vpack.c.b16 %v773, %v773
  %v838 = vpack.c.b16 %v774, %v774
  %v839 = vpack.c.b16 %v775, %v775
  %v840 = vpack.c.b16 %v776, %v776
  %v841 = vpack.c.b16 %v777, %v777
  %v842 = vpack.c.b16 %v778, %v778
  %v843 = vpack.c.b16 %v779, %v779
  %v844 = vpack.c.b16 %v780, %v780
  %v845 = vpack.c.b16 %v781, %v781
  %v846 = vpack.c.b16 %v782, %v782
  %v847 = vpack.c.b16 %v783, %v783
  %v848 = vpack.c.b16 %v784, %v784
  %v849 = vpack.c.b16 %v785, %v785
  %v850 = vpack.c.b16 %v786, %v786
  %v851 = vpack.c.b16 %v787, %v787
  %v852 = vpack.c.b16 %v788, %v788
  %v853 = vpack.c.b16 %v789, %v789
  %v854 = vpack.c.b16 %v790, %v790
  %v855 = vpack.c.b16 %v791, %v791
  %v856 = vpack.c.b16 %v792, %v792
  %v857 = vpack.c.b16 %v793, %v793
  %v858 = vpack.c.b16 %v794, %v794
  %v859 = vpack.c.b16 %v795, %v795
  %v860 = vpack.c.b16 %v796, %v796
  %v861 = vpack.c.b16 %v797, %v797
  %v862 = vpack.c.b16 %v798, %v798
  %v863 = vpack.c.b16 %v799, %v799
  %v864 = vpack.c.b16 %v800, %v800
  %v865 = vpack.c.b16 %v801, %v801
  %v866 = vpack.c.b16 %v802, %v802
  %v867 = vpack.c.b16 %v803, %v803
  %v868 = vpack.c.b16 %v804, %v804
  %v869 = vpack.c.b16 %v805, %v805
  %v870 = vpack.c.b16 %v806, %v806
  %v871 = vpack.c.b16 %v807, %v807
  %v872 = vpack.c.b16 %v808, %v808
  %v873 = vpack.c.b16 %v809, %v809
  %v874 = vpack.c.b16 %v810, %v810
  %v875 = vpack.c.b16 %v811, %v811
  %v876 = vpack.c.b16 %v812, %v812
  %v877 = vpack.c.b16 %v813, %v813
  %v878 = vpack.c.b16 %v814, %v814
  %v879 = vpack.c.b16 %v815, %v815
  %v880 = vpack.c.b16 %v816, %v816
  %v881 = vpack.c.b16 %v817, %v817
  %v882 = vpack.c.b16 %v818, %v818
  %v883 = vpack.c.b16 %v819, %v819
  %v884 = vpack.c.b16 %v820, %v820
  %v885 = vpack.c.b16 %v821, %v821
  %v886 = vpack.c.b16 %v822, %v822
  %v887 = vpack.c.b16 %v823, %v823
  %v888 = vpack.c.b16 %v824, %v824
  %v889 = vpack.c.b16 %v825, %v825
  %v890 = vpack.c.b16 %v826, %v826
  %v891 = vpack.c.b16 %v827, %v827
  %v892 = vpack.c.b16 %v828, %v828
  %v893 = vpack.c.b16 %v829, %v829
  %v894 = vpack.c.b16 %v830, %v830
  %v895 = vpack.c.b16 %v831, %v831
  %960 = vst [vmem:[%s3] sm:$0xf] %v832
  %961 = vst [vmem:[%s3 + $0x4] sm:$0xf] %v833
  %962 = vst [vmem:[%s3 + $0x8] sm:$0xf] %v834
  %963 = vst [vmem:[%s3 + $0xc] sm:$0xf] %v835
  %964 = vst [vmem:[%s3 + $0x10] sm:$0xf] %v836
  %965 = vst [vmem:[%s3 + $0x14] sm:$0xf] %v837
  %966 = vst [vmem:[%s3 + $0x18] sm:$0xf] %v838
  %967 = vst [vmem:[%s3 + $0x1c] sm:$0xf] %v839
  %968 = vst [vmem:[%s3 + $0x20] sm:$0xf] %v840
  %969 = vst [vmem:[%s3 + $0x24] sm:$0xf] %v841
  %970 = vst [vmem:[%s3 + $0x28] sm:$0xf] %v842
  %971 = vst [vmem:[%s3 + $0x2c] sm:$0xf] %v843
  %972 = vst [vmem:[%s3 + $0x30] sm:$0xf] %v844
  %973 = vst [vmem:[%s3 + $0x34] sm:$0xf] %v845
  %974 = vst [vmem:[%s3 + $0x38] sm:$0xf] %v846
  %975 = vst [vmem:[%s3 + $0x3c] sm:$0xf] %v847
  %976 = vst [vmem:[%s3 + $0x40] sm:$0xf] %v848
  %977 = vst [vmem:[%s3 + $0x44] sm:$0xf] %v849
  %978 = vst [vmem:[%s3 + $0x48] sm:$0xf] %v850
  %979 = vst [vmem:[%s3 + $0x4c] sm:$0xf] %v851
  %980 = vst [vmem:[%s3 + $0x50] sm:$0xf] %v852
  %981 = vst [vmem:[%s3 + $0x54] sm:$0xf] %v853
  %982 = vst [vmem:[%s3 + $0x58] sm:$0xf] %v854
  %983 = vst [vmem:[%s3 + $0x5c] sm:$0xf] %v855
  %984 = vst [vmem:[%s3 + $0x60] sm:$0xf] %v856
  %985 = vst [vmem:[%s3 + $0x64] sm:$0xf] %v857
  %986 = vst [vmem:[%s3 + $0x68] sm:$0xf] %v858
  %987 = vst [vmem:[%s3 + $0x6c] sm:$0xf] %v859
  %988 = vst [vmem:[%s3 + $0x70] sm:$0xf] %v860
  %989 = vst [vmem:[%s3 + $0x74] sm:$0xf] %v861
  %990 = vst [vmem:[%s3 + $0x78] sm:$0xf] %v862
  %991 = vst [vmem:[%s3 + $0x7c] sm:$0xf] %v863
  %992 = vst [vmem:[%s3 + $0x80] sm:$0xf] %v864
  %993 = vst [vmem:[%s3 + $0x84] sm:$0xf] %v865
  %994 = vst [vmem:[%s3 + $0x88] sm:$0xf] %v866
  %995 = vst [vmem:[%s3 + $0x8c] sm:$0xf] %v867
  %996 = vst [vmem:[%s3 + $0x90] sm:$0xf] %v868
  %997 = vst [vmem:[%s3 + $0x94] sm:$0xf] %v869
  %998 = vst [vmem:[%s3 + $0x98] sm:$0xf] %v870
  %999 = vst [vmem:[%s3 + $0x9c] sm:$0xf] %v871
  %1000 = vst [vmem:[%s3 + $0xa0] sm:$0xf] %v872
  %1001 = vst [vmem:[%s3 + $0xa4] sm:$0xf] %v873
  %1002 = vst [vmem:[%s3 + $0xa8] sm:$0xf] %v874
  %1003 = vst [vmem:[%s3 + $0xac] sm:$0xf] %v875
  %1004 = vst [vmem:[%s3 + $0xb0] sm:$0xf] %v876
  %1005 = vst [vmem:[%s3 + $0xb4] sm:$0xf] %v877
  %1006 = vst [vmem:[%s3 + $0xb8] sm:$0xf] %v878
  %1007 = vst [vmem:[%s3 + $0xbc] sm:$0xf] %v879
  %1008 = vst [vmem:[%s3 + $0xc0] sm:$0xf] %v880
  %1009 = vst [vmem:[%s3 + $0xc4] sm:$0xf] %v881
  %1010 = vst [vmem:[%s3 + $0xc8] sm:$0xf] %v882
  %1011 = vst [vmem:[%s3 + $0xcc] sm:$0xf] %v883
  %1012 = vst [vmem:[%s3 + $0xd0] sm:$0xf] %v884
  %1013 = vst [vmem:[%s3 + $0xd4] sm:$0xf] %v885
  %1014 = vst [vmem:[%s3 + $0xd8] sm:$0xf] %v886
  %1015 = vst [vmem:[%s3 + $0xdc] sm:$0xf] %v887
  %1016 = vst [vmem:[%s3 + $0xe0] sm:$0xf] %v888
  %1017 = vst [vmem:[%s3 + $0xe4] sm:$0xf] %v889
  %1018 = vst [vmem:[%s3 + $0xe8] sm:$0xf] %v890
  %1019 = vst [vmem:[%s3 + $0xec] sm:$0xf] %v891
  %1020 = vst [vmem:[%s3 + $0xf0] sm:$0xf] %v892
  %1021 = vst [vmem:[%s3 + $0xf4] sm:$0xf] %v893
  %1022 = vst [vmem:[%s3 + $0xf8] sm:$0xf] %v894
  %1023 = vst [vmem:[%s3 + $0xfc] sm:$0xf] %v895
  // Predicated region
  $region14: #{bottleneck_forward.3} parent=0 // pred_check
    _
  $region15: #{bottleneck_forward.3} parent=0 // pred_check_branch
    %1025 = sbr.rel (0) target = $region17
  $region16: #{bottleneck_forward.3} parent=0 // pred_region
    _
  $region17: #{bottleneck_forward.3} parent=0 // pred_fallthru
    _
  // Predicated region
  $region18: #{bottleneck_forward.3} parent=0 // pred_check
    _
  $region19: #{bottleneck_forward.3} parent=0 // pred_check_branch
    %1027 = sbr.rel (0) target = $region21
  $region20: #{bottleneck_forward.3} parent=0 // pred_region
    _
  $region21: #{bottleneck_forward.3} parent=0 // pred_fallthru
    _

// kernel: bottleneck_forward.5
$region0: #{bottleneck_forward.5}
  #allocation0 [shape = 'u32[]', space=smem, size = 0x4, offset = 0x4, fixed_abs, tag = 'smem constant byte address 0x4 - core index']
  #allocation1 [shape = 'u32[144,128]{1,0:T(1,128)}', space=vmem, size = 0x12000, scoped, tag = 'internal scratch']
  %s0 = inlined_call_operand.vmem [shape: bf16[128,128], index: 0, kind: input, shape index: {}]
  %s1 = inlined_call_operand.vmem [shape: bf16[128,128], index: 1, kind: input, shape index: {}]
  %s2 = inlined_call_operand.vmem [shape: bf16[128,16], index: 2, kind: input, shape index: {}]
  %s3 = inlined_call_operand.vmem [shape: bf16[16,128], index: 3, kind: input, shape index: {}]
  %s4 = inlined_call_operand.vmem [shape: f32[1,128], index: 4, kind: input, shape index: {}]
  %s5 = inlined_call_operand.vmem [shape: bf16[128,128], index: 5, kind: output, shape index: {}]
  %s6 = sld [smem:[#allocation0]]
  $region30: #{bottleneck_forward.5} parent=0
    _
  %s8 = ssub.s32 1, %s6
  %s9 = scalar_select 0, %s8, %s6
  // Predicated region
  $region2: #{bottleneck_forward.5} parent=0 // pred_check
    _
  $region3: #{bottleneck_forward.5} parent=0 // pred_check_branch
    %11 = sbr.rel (0) target = $region5
  $region4: #{bottleneck_forward.5} parent=0 // pred_region
    _
  $region5: #{bottleneck_forward.5} parent=0 // pred_fallthru
    _
  // Predicated region
  $region6: #{bottleneck_forward.5} parent=0 // pred_check
    _
  $region7: #{bottleneck_forward.5} parent=0 // pred_check_branch
    %13 = sbr.rel (0) target = $region9
  $region8: #{bottleneck_forward.5} parent=0 // pred_region
    _
  $region9: #{bottleneck_forward.5} parent=0 // pred_fallthru
    _
  // Predicated region
  $region10: #{bottleneck_forward.5} parent=0 // pred_check
    _
  $region11: #{bottleneck_forward.5} parent=0 // pred_check_branch
    %15 = sbr.rel (0) target = $region13
  $region12: #{bottleneck_forward.5} parent=0 // pred_region
    _
  $region13: #{bottleneck_forward.5} parent=0 // pred_fallthru
    _
  // Predicated region
  $region14: #{bottleneck_forward.5} parent=0 // pred_check
    _
  $region15: #{bottleneck_forward.5} parent=0 // pred_check_branch
    %17 = sbr.rel (0) target = $region17
  $region16: #{bottleneck_forward.5} parent=0 // pred_region
    _
  $region17: #{bottleneck_forward.5} parent=0 // pred_fallthru
    _
  // Predicated region
  $region18: #{bottleneck_forward.5} parent=0 // pred_check
    _
  $region19: #{bottleneck_forward.5} parent=0 // pred_check_branch
    %19 = sbr.rel (0) target = $region21
  $region20: #{bottleneck_forward.5} parent=0 // pred_region
    _
  $region21: #{bottleneck_forward.5} parent=0 // pred_fallthru
    _
  %v21 = vld [vmem:[%s0] sm:$0xf]
  %v22 = vld [vmem:[%s0 + $0x4] sm:$0xf]
  %v23 = vld [vmem:[%s0 + $0x8] sm:$0xf]
  %v24 = vld [vmem:[%s0 + $0xc] sm:$0xf]
  %v25 = vld [vmem:[%s0 + $0x10] sm:$0xf]
  %v26 = vld [vmem:[%s0 + $0x14] sm:$0xf]
  %v27 = vld [vmem:[%s0 + $0x18] sm:$0xf]
  %v28 = vld [vmem:[%s0 + $0x1c] sm:$0xf]
  %v29 = vld [vmem:[%s0 + $0x20] sm:$0xf]
  %v30 = vld [vmem:[%s0 + $0x24] sm:$0xf]
  %v31 = vld [vmem:[%s0 + $0x28] sm:$0xf]
  %v32 = vld [vmem:[%s0 + $0x2c] sm:$0xf]
  %v33 = vld [vmem:[%s0 + $0x30] sm:$0xf]
  %v34 = vld [vmem:[%s0 + $0x34] sm:$0xf]
  %v35 = vld [vmem:[%s0 + $0x38] sm:$0xf]
  %v36 = vld [vmem:[%s0 + $0x3c] sm:$0xf]
  %v37 = vld [vmem:[%s1] sm:$0xf]
  %v38 = vld [vmem:[%s1 + $0x4] sm:$0xf]
  %v39 = vld [vmem:[%s1 + $0x8] sm:$0xf]
  %v40 = vld [vmem:[%s1 + $0xc] sm:$0xf]
  %v41 = vld [vmem:[%s1 + $0x10] sm:$0xf]
  %v42 = vld [vmem:[%s1 + $0x14] sm:$0xf]
  %v43 = vld [vmem:[%s1 + $0x18] sm:$0xf]
  %v44 = vld [vmem:[%s1 + $0x1c] sm:$0xf]
  %v45 = vld [vmem:[%s1 + $0x20] sm:$0xf]
  %v46 = vld [vmem:[%s1 + $0x24] sm:$0xf]
  %v47 = vld [vmem:[%s1 + $0x28] sm:$0xf]
  %v48 = vld [vmem:[%s1 + $0x2c] sm:$0xf]
  %v49 = vld [vmem:[%s1 + $0x30] sm:$0xf]
  %v50 = vld [vmem:[%s1 + $0x34] sm:$0xf]
  %v51 = vld [vmem:[%s1 + $0x38] sm:$0xf]
  %v52 = vld [vmem:[%s1 + $0x3c] sm:$0xf]
  %v53 = vld [vmem:[%s2] sm:$0xf]
  %v54 = vld [vmem:[%s2 + $0x4] sm:$0xf]
  %v55 = vld [vmem:[%s2 + $0x8] sm:$0xf]
  %v56 = vld [vmem:[%s2 + $0xc] sm:$0xf]
  %v57 = vld [vmem:[%s2 + $0x10] sm:$0xf]
  %v58 = vld [vmem:[%s2 + $0x14] sm:$0xf]
  %v59 = vld [vmem:[%s2 + $0x18] sm:$0xf]
  %v60 = vld [vmem:[%s2 + $0x1c] sm:$0xf]
  %v61 = vld [vmem:[%s2 + $0x20] sm:$0xf]
  %v62 = vld [vmem:[%s2 + $0x24] sm:$0xf]
  %v63 = vld [vmem:[%s2 + $0x28] sm:$0xf]
  %v64 = vld [vmem:[%s2 + $0x2c] sm:$0xf]
  %v65 = vld [vmem:[%s2 + $0x30] sm:$0xf]
  %v66 = vld [vmem:[%s2 + $0x34] sm:$0xf]
  %v67 = vld [vmem:[%s2 + $0x38] sm:$0xf]
  %v68 = vld [vmem:[%s2 + $0x3c] sm:$0xf]
  %v69 = vld [vmem:[%s3] sm:$0xf]
  %v70 = vld [vmem:[%s3 + $0x4] sm:$0xf]
  %v87 = vunpack.c.l.b16 %v53
  %v88 = vunpack.c.l.b16 %v54
  %v89 = vunpack.c.l.b16 %v55
  %v90 = vunpack.c.l.b16 %v56
  %v91 = vunpack.c.l.b16 %v57
  %v92 = vunpack.c.l.b16 %v58
  %v93 = vunpack.c.l.b16 %v59
  %v94 = vunpack.c.l.b16 %v60
  %v95 = vunpack.c.l.b16 %v61
  %v96 = vunpack.c.l.b16 %v62
  %v97 = vunpack.c.l.b16 %v63
  %v98 = vunpack.c.l.b16 %v64
  %v99 = vunpack.c.l.b16 %v65
  %v100 = vunpack.c.l.b16 %v66
  %v101 = vunpack.c.l.b16 %v67
  %v102 = vunpack.c.l.b16 %v68
  %v103 = vpack.c.b16 %v88, %v87
  %v104 = vpack.c.b16 %v90, %v89
  %v105 = vpack.c.b16 %v92, %v91
  %v106 = vpack.c.b16 %v94, %v93
  %v107 = vpack.c.b16 %v96, %v95
  %v108 = vpack.c.b16 %v98, %v97
  %v109 = vpack.c.b16 %v100, %v99
  %v110 = vpack.c.b16 %v102, %v101
  %v113 = vunpack.c.l.b16 %v69
  %v114 = vunpack.c.l.b16 %v70
  %v115 = vpack.c.b16 %v114, %v113
  %vm117 = vcmask 130048
  %v119 = vsel %vm117, %v103, 0
  %v122 = vsel %vm117, %v104, 0
  %v125 = vsel %vm117, %v105, 0
  %v128 = vsel %vm117, %v106, 0
  %v131 = vsel %vm117, %v107, 0
  %v134 = vsel %vm117, %v108, 0
  %v137 = vsel %vm117, %v109, 0
  %v140 = vsel %vm117, %v110, 0
  %142 = vmatprep.subr.bf16.mxu0 0
  %143 = vmatpush1.bf16.msra.mxu0 0
  %144 = vmatprep.subr.bf16.mxu0 0
  %145 = vmatpush1.bf16.msra.mxu0 0
  %146 = vmatprep.subr.bf16.mxu0 0
  %147 = vmatpush1.bf16.msra.mxu0 0
  %148 = vmatprep.subr.bf16.mxu0 0
  %149 = vmatpush1.bf16.msra.mxu0 0
  %150 = vmatprep.subr.bf16.mxu0 0
  %151 = vmatpush1.bf16.msra.mxu0 0
  %152 = vmatprep.subr.bf16.mxu0 0
  %153 = vmatpush1.bf16.msra.mxu0 0
  %154 = vmatprep.subr.bf16.mxu0 0
  %155 = vmatpush1.bf16.msra.mxu0 0
  %156 = vmatprep.subr.bf16.mxu0 0
  %157 = vmatpush1.bf16.msra.mxu0 %v115
  %158 = vmatprep.subr.bf16.mxu0 0
  %159 = vmatpush2.bf16.msra.mxu0 0
  %160 = vmatprep.subr.bf16.mxu0 0
  %161 = vmatpush2.bf16.msra.mxu0 0
  %162 = vmatprep.subr.bf16.mxu0 0
  %163 = vmatpush2.bf16.msra.mxu0 0
  %164 = vmatprep.subr.bf16.mxu0 0
  %165 = vmatpush2.bf16.msra.mxu0 0
  %166 = vmatprep.subr.bf16.mxu0 0
  %167 = vmatpush2.bf16.msra.mxu0 0
  %168 = vmatprep.subr.bf16.mxu0 0
  %169 = vmatpush2.bf16.msra.mxu0 0
  %170 = vmatprep.subr.bf16.mxu0 0
  %171 = vmatpush2.bf16.msra.mxu0 0
  %172 = vmatprep.subr.bf16.mxu0 0
  %173 = vmatpush2.bf16.msra.mxu0 0
  %174 = vmatprep.mubr.bf16.mxu0 0
  %175 = vmatmul.mubr.bf16.gmra.mxu0 %v119
  %v176 = vpop.f32.mrf.mxu0
  %v177 = vadd.f32 0.0, %v176
  %v178 = vpop.f32.mrf.mxu0
  %v179 = vpop.f32.mrf.mxu0
  %v180 = vadd.f32 0.0, %v179
  %v181 = vpop.f32.mrf.mxu0
  %182 = vmatprep.mubr.bf16.mxu0 0
  %183 = vmatmul.mubr.bf16.gmra.mxu0 %v122
  %v184 = vpop.f32.mrf.mxu0
  %v185 = vadd.f32 0.0, %v184
  %v186 = vpop.f32.mrf.mxu0
  %v187 = vpop.f32.mrf.mxu0
  %v188 = vadd.f32 0.0, %v187
  %v189 = vpop.f32.mrf.mxu0
  %190 = vmatprep.mubr.bf16.mxu0 0
  %191 = vmatmul.mubr.bf16.gmra.mxu0 %v125
  %v192 = vpop.f32.mrf.mxu0
  %v193 = vadd.f32 0.0, %v192
  %v194 = vpop.f32.mrf.mxu0
  %v195 = vpop.f32.mrf.mxu0
  %v196 = vadd.f32 0.0, %v195
  %v197 = vpop.f32.mrf.mxu0
  %198 = vmatprep.mubr.bf16.mxu0 0
  %199 = vmatmul.mubr.bf16.gmra.mxu0 %v128
  %v200 = vpop.f32.mrf.mxu0
  %v201 = vadd.f32 0.0, %v200
  %v202 = vpop.f32.mrf.mxu0
  %v203 = vpop.f32.mrf.mxu0
  %v204 = vadd.f32 0.0, %v203
  %v205 = vpop.f32.mrf.mxu0
  %206 = vmatprep.mubr.bf16.mxu0 0
  %207 = vmatmul.mubr.bf16.gmra.mxu0 %v131
  %v208 = vpop.f32.mrf.mxu0
  %v209 = vadd.f32 0.0, %v208
  %v210 = vpop.f32.mrf.mxu0
  %v211 = vpop.f32.mrf.mxu0
  %v212 = vadd.f32 0.0, %v211
  %v213 = vpop.f32.mrf.mxu0
  %214 = vmatprep.mubr.bf16.mxu0 0
  %215 = vmatmul.mubr.bf16.gmra.mxu0 %v134
  %v216 = vpop.f32.mrf.mxu0
  %v217 = vadd.f32 0.0, %v216
  %v218 = vpop.f32.mrf.mxu0
  %v219 = vpop.f32.mrf.mxu0
  %v220 = vadd.f32 0.0, %v219
  %v221 = vpop.f32.mrf.mxu0
  %222 = vmatprep.mubr.bf16.mxu0 0
  %223 = vmatmul.mubr.bf16.gmra.mxu0 %v137
  %v224 = vpop.f32.mrf.mxu0
  %v225 = vadd.f32 0.0, %v224
  %v226 = vpop.f32.mrf.mxu0
  %v227 = vpop.f32.mrf.mxu0
  %v228 = vadd.f32 0.0, %v227
  %v229 = vpop.f32.mrf.mxu0
  %230 = vmatprep.mubr.bf16.mxu0 0
  %231 = vmatmul.mubr.bf16.gmra.mxu0 %v140
  %v232 = vpop.f32.mrf.mxu0
  %v233 = vadd.f32 0.0, %v232
  %v234 = vpop.f32.mrf.mxu0
  %v235 = vpop.f32.mrf.mxu0
  %v236 = vadd.f32 0.0, %v235
  %v237 = vpop.f32.mrf.mxu0
  %238 = vdwg.mxu0
  %v255 = vunpack.c.l.b16 %v21
  %v256 = vunpack.c.l.b16 %v22
  %v257 = vunpack.c.l.b16 %v23
  %v258 = vunpack.c.l.b16 %v24
  %v259 = vunpack.c.l.b16 %v25
  %v260 = vunpack.c.l.b16 %v26
  %v261 = vunpack.c.l.b16 %v27
  %v262 = vunpack.c.l.b16 %v28
  %v263 = vunpack.c.l.b16 %v29
  %v264 = vunpack.c.l.b16 %v30
  %v265 = vunpack.c.l.b16 %v31
  %v266 = vunpack.c.l.b16 %v32
  %v267 = vunpack.c.l.b16 %v33
  %v268 = vunpack.c.l.b16 %v34
  %v269 = vunpack.c.l.b16 %v35
  %v270 = vunpack.c.l.b16 %v36
  %v271 = vpack.c.b16 %v256, %v255
  %v272 = vpack.c.b16 %v258, %v257
  %v273 = vpack.c.b16 %v260, %v259
  %v274 = vpack.c.b16 %v262, %v261
  %v275 = vpack.c.b16 %v264, %v263
  %v276 = vpack.c.b16 %v266, %v265
  %v277 = vpack.c.b16 %v268, %v267
  %v278 = vpack.c.b16 %v270, %v269
  %v303 = vunpack.c.l.b16 %v37
  %v304 = vunpack.c.l.b16 %v38
  %v305 = vunpack.c.l.b16 %v39
  %v306 = vunpack.c.l.b16 %v40
  %v307 = vunpack.c.l.b16 %v41
  %v308 = vunpack.c.l.b16 %v42
  %v309 = vunpack.c.l.b16 %v43
  %v310 = vunpack.c.l.b16 %v44
  %v311 = vunpack.c.l.b16 %v45
  %v312 = vunpack.c.l.b16 %v46
  %v313 = vunpack.c.l.b16 %v47
  %v314 = vunpack.c.l.b16 %v48
  %v315 = vunpack.c.l.b16 %v49
  %v316 = vunpack.c.l.b16 %v50
  %v317 = vunpack.c.l.b16 %v51
  %v318 = vunpack.c.l.b16 %v52
  %v319 = vpack.c.b16 %v304, %v303
  %v320 = vpack.c.b16 %v306, %v305
  %v321 = vpack.c.b16 %v308, %v307
  %v322 = vpack.c.b16 %v310, %v309
  %v323 = vpack.c.b16 %v312, %v311
  %v324 = vpack.c.b16 %v314, %v313
  %v325 = vpack.c.b16 %v316, %v315
  %v326 = vpack.c.b16 %v318, %v317
  %335 = vmatprep.subr.bf16.mxu0 0
  %336 = vmatpush1.bf16.msra.mxu0 %v326
  %337 = vmatprep.subr.bf16.mxu0 0
  %338 = vmatpush1.bf16.msra.mxu0 %v325
  %339 = vmatprep.subr.bf16.mxu0 0
  %340 = vmatpush1.bf16.msra.mxu0 %v324
  %341 = vmatprep.subr.bf16.mxu0 0
  %342 = vmatpush1.bf16.msra.mxu0 %v323
  %343 = vmatprep.subr.bf16.mxu0 0
  %344 = vmatpush1.bf16.msra.mxu0 %v322
  %345 = vmatprep.subr.bf16.mxu0 0
  %346 = vmatpush1.bf16.msra.mxu0 %v321
  %347 = vmatprep.subr.bf16.mxu0 0
  %348 = vmatpush1.bf16.msra.mxu0 %v320
  %349 = vmatprep.subr.bf16.mxu0 0
  %350 = vmatpush1.bf16.msra.mxu0 %v319
  %351 = vmatprep.subr.bf16.mxu0 0
  %352 = vmatpush2.bf16.msra.mxu0 0
  %353 = vmatprep.subr.bf16.mxu0 0
  %354 = vmatpush2.bf16.msra.mxu0 0
  %355 = vmatprep.subr.bf16.mxu0 0
  %356 = vmatpush2.bf16.msra.mxu0 0
  %357 = vmatprep.subr.bf16.mxu0 0
  %358 = vmatpush2.bf16.msra.mxu0 0
  %359 = vmatprep.subr.bf16.mxu0 0
  %360 = vmatpush2.bf16.msra.mxu0 0
  %361 = vmatprep.subr.bf16.mxu0 0
  %362 = vmatpush2.bf16.msra.mxu0 0
  %363 = vmatprep.subr.bf16.mxu0 0
  %364 = vmatpush2.bf16.msra.mxu0 0
  %365 = vmatprep.subr.bf16.mxu0 0
  %366 = vmatpush2.bf16.msra.mxu0 0
  %367 = vmatprep.mubr.bf16.mxu0 0
  %368 = vmatmul.mubr.bf16.gmra.mxu0 %v271
  %v369 = vpop.f32.mrf.mxu0
  %v370 = vadd.f32 %v177, %v369
  %v371 = vpop.f32.mrf.mxu0
  %v372 = vpop.f32.mrf.mxu0
  %v373 = vadd.f32 %v180, %v372
  %v374 = vpop.f32.mrf.mxu0
  %375 = vmatprep.mubr.bf16.mxu0 0
  %376 = vmatmul.mubr.bf16.gmra.mxu0 %v272
  %v377 = vpop.f32.mrf.mxu0
  %v378 = vadd.f32 %v185, %v377
  %v379 = vpop.f32.mrf.mxu0
  %v380 = vpop.f32.mrf.mxu0
  %v381 = vadd.f32 %v188, %v380
  %v382 = vpop.f32.mrf.mxu0
  %383 = vmatprep.mubr.bf16.mxu0 0
  %384 = vmatmul.mubr.bf16.gmra.mxu0 %v273
  %v385 = vpop.f32.mrf.mxu0
  %v386 = vadd.f32 %v193, %v385
  %v387 = vpop.f32.mrf.mxu0
  %v388 = vpop.f32.mrf.mxu0
  %v389 = vadd.f32 %v196, %v388
  %v390 = vpop.f32.mrf.mxu0
  %391 = vmatprep.mubr.bf16.mxu0 0
  %392 = vmatmul.mubr.bf16.gmra.mxu0 %v274
  %v393 = vpop.f32.mrf.mxu0
  %v394 = vadd.f32 %v201, %v393
  %v395 = vpop.f32.mrf.mxu0
  %v396 = vpop.f32.mrf.mxu0
  %v397 = vadd.f32 %v204, %v396
  %v398 = vpop.f32.mrf.mxu0
  %399 = vmatprep.mubr.bf16.mxu0 0
  %400 = vmatmul.mubr.bf16.gmra.mxu0 %v275
  %v401 = vpop.f32.mrf.mxu0
  %v402 = vadd.f32 %v209, %v401
  %v403 = vpop.f32.mrf.mxu0
  %v404 = vpop.f32.mrf.mxu0
  %v405 = vadd.f32 %v212, %v404
  %v406 = vpop.f32.mrf.mxu0
  %407 = vmatprep.mubr.bf16.mxu0 0
  %408 = vmatmul.mubr.bf16.gmra.mxu0 %v276
  %v409 = vpop.f32.mrf.mxu0
  %v410 = vadd.f32 %v217, %v409
  %v411 = vpop.f32.mrf.mxu0
  %v412 = vpop.f32.mrf.mxu0
  %v413 = vadd.f32 %v220, %v412
  %v414 = vpop.f32.mrf.mxu0
  %415 = vmatprep.mubr.bf16.mxu0 0
  %416 = vmatmul.mubr.bf16.gmra.mxu0 %v277
  %v417 = vpop.f32.mrf.mxu0
  %v418 = vadd.f32 %v225, %v417
  %v419 = vpop.f32.mrf.mxu0
  %v420 = vpop.f32.mrf.mxu0
  %v421 = vadd.f32 %v228, %v420
  %v422 = vpop.f32.mrf.mxu0
  %423 = vmatprep.mubr.bf16.mxu0 0
  %424 = vmatmul.mubr.bf16.gmra.mxu0 %v278
  %v425 = vpop.f32.mrf.mxu0
  %v426 = vadd.f32 %v233, %v425
  %v427 = vpop.f32.mrf.mxu0
  %v428 = vpop.f32.mrf.mxu0
  %v429 = vadd.f32 %v236, %v428
  %v430 = vpop.f32.mrf.mxu0
  %431 = vdwg.mxu0
  %v432 = vld [vmem:[%s4] sm:$0x1]
  %v434 = vlaneseq
  %v435 = vshrl.u32 %v434, 7
  %v436 = vsub.s32 0, %v435
  %v437 = vrot.slane %v432, %v436
  %v439 = vadd.f32 %v370, %v437
  %v440 = vadd.f32 %v373, %v437
  %v441 = vadd.f32 %v378, %v437
  %v442 = vadd.f32 %v381, %v437
  %v443 = vadd.f32 %v386, %v437
  %v444 = vadd.f32 %v389, %v437
  %v445 = vadd.f32 %v394, %v437
  %v446 = vadd.f32 %v397, %v437
  %v447 = vadd.f32 %v402, %v437
  %v448 = vadd.f32 %v405, %v437
  %v449 = vadd.f32 %v410, %v437
  %v450 = vadd.f32 %v413, %v437
  %v451 = vadd.f32 %v418, %v437
  %v452 = vadd.f32 %v421, %v437
  %v453 = vadd.f32 %v426, %v437
  %v454 = vadd.f32 %v429, %v437
  %v455 = vmax.f32 %v439, 0.0
  %v456 = vmax.f32 %v440, 0.0
  %v457 = vmax.f32 %v441, 0.0
  %v458 = vmax.f32 %v442, 0.0
  %v459 = vmax.f32 %v443, 0.0
  %v460 = vmax.f32 %v444, 0.0
  %v461 = vmax.f32 %v445, 0.0
  %v462 = vmax.f32 %v446, 0.0
  %v463 = vmax.f32 %v447, 0.0
  %v464 = vmax.f32 %v448, 0.0
  %v465 = vmax.f32 %v449, 0.0
  %v466 = vmax.f32 %v450, 0.0
  %v467 = vmax.f32 %v451, 0.0
  %v468 = vmax.f32 %v452, 0.0
  %v469 = vmax.f32 %v453, 0.0
  %v470 = vmax.f32 %v454, 0.0
  %v471 = vpack.c.bf16 %v456, %v455
  %v472 = vpack.c.bf16 %v458, %v457
  %v473 = vpack.c.bf16 %v460, %v459
  %v474 = vpack.c.bf16 %v462, %v461
  %v475 = vpack.c.bf16 %v464, %v463
  %v476 = vpack.c.bf16 %v466, %v465
  %v477 = vpack.c.bf16 %v468, %v467
  %v478 = vpack.c.bf16 %v470, %v469
  %v487 = vunpack.c.l.b16 %v471
  %v488 = vunpack.c.h.b16 %v471
  %v489 = vunpack.c.l.b16 %v472
  %v490 = vunpack.c.h.b16 %v472
  %v491 = vunpack.c.l.b16 %v473
  %v492 = vunpack.c.h.b16 %v473
  %v493 = vunpack.c.l.b16 %v474
  %v494 = vunpack.c.h.b16 %v474
  %v495 = vunpack.c.l.b16 %v475
  %v496 = vunpack.c.h.b16 %v475
  %v497 = vunpack.c.l.b16 %v476
  %v498 = vunpack.c.h.b16 %v476
  %v499 = vunpack.c.l.b16 %v477
  %v500 = vunpack.c.h.b16 %v477
  %v501 = vunpack.c.l.b16 %v478
  %v502 = vunpack.c.h.b16 %v478
  %v503 = vpack.c.b16 %v487, %v487
  %v504 = vpack.c.b16 %v488, %v488
  %v505 = vpack.c.b16 %v489, %v489
  %v506 = vpack.c.b16 %v490, %v490
  %v507 = vpack.c.b16 %v491, %v491
  %v508 = vpack.c.b16 %v492, %v492
  %v509 = vpack.c.b16 %v493, %v493
  %v510 = vpack.c.b16 %v494, %v494
  %v511 = vpack.c.b16 %v495, %v495
  %v512 = vpack.c.b16 %v496, %v496
  %v513 = vpack.c.b16 %v497, %v497
  %v514 = vpack.c.b16 %v498, %v498
  %v515 = vpack.c.b16 %v499, %v499
  %v516 = vpack.c.b16 %v500, %v500
  %v517 = vpack.c.b16 %v501, %v501
  %v518 = vpack.c.b16 %v502, %v502
  %535 = vst [vmem:[%s5] sm:$0xf] %v503
  %536 = vst [vmem:[%s5 + $0x4] sm:$0xf] %v504
  %537 = vst [vmem:[%s5 + $0x8] sm:$0xf] %v505
  %538 = vst [vmem:[%s5 + $0xc] sm:$0xf] %v506
  %539 = vst [vmem:[%s5 + $0x10] sm:$0xf] %v507
  %540 = vst [vmem:[%s5 + $0x14] sm:$0xf] %v508
  %541 = vst [vmem:[%s5 + $0x18] sm:$0xf] %v509
  %542 = vst [vmem:[%s5 + $0x1c] sm:$0xf] %v510
  %543 = vst [vmem:[%s5 + $0x20] sm:$0xf] %v511
  %544 = vst [vmem:[%s5 + $0x24] sm:$0xf] %v512
  %545 = vst [vmem:[%s5 + $0x28] sm:$0xf] %v513
  %546 = vst [vmem:[%s5 + $0x2c] sm:$0xf] %v514
  %547 = vst [vmem:[%s5 + $0x30] sm:$0xf] %v515
  %548 = vst [vmem:[%s5 + $0x34] sm:$0xf] %v516
  %549 = vst [vmem:[%s5 + $0x38] sm:$0xf] %v517
  %550 = vst [vmem:[%s5 + $0x3c] sm:$0xf] %v518
  // Predicated region
  $region22: #{bottleneck_forward.5} parent=0 // pred_check
    _
  $region23: #{bottleneck_forward.5} parent=0 // pred_check_branch
    %552 = sbr.rel (0) target = $region25
  $region24: #{bottleneck_forward.5} parent=0 // pred_region
    _
  $region25: #{bottleneck_forward.5} parent=0 // pred_fallthru
    _
  // Predicated region
  $region26: #{bottleneck_forward.5} parent=0 // pred_check
    _
  $region27: #{bottleneck_forward.5} parent=0 // pred_check_branch
    %554 = sbr.rel (0) target = $region29
  $region28: #{bottleneck_forward.5} parent=0 // pred_region
    _
  $region29: #{bottleneck_forward.5} parent=0 // pred_fallthru
    _

// kernel: bottleneck_forward.4
$region0: #{bottleneck_forward.4}
  #allocation0 [shape = 'u32[]', space=smem, size = 0x4, offset = 0x4, fixed_abs, tag = 'smem constant byte address 0x4 - core index']
  #allocation1 [shape = 'u32[144,128]{1,0:T(1,128)}', space=vmem, size = 0x12000, scoped, tag = 'internal scratch']
  %s0 = inlined_call_operand.vmem [shape: bf16[2,18,8,384], index: 0, kind: input, shape index: {}, may-alias: {0,1,2}]
  %s1 = inlined_call_operand.vmem [shape: bf16[2,18,8,384], index: 1, kind: input, shape index: {}, may-alias: {0,1,2}]
  %s2 = inlined_call_operand.vmem [shape: bf16[2,18,8,384], index: 2, kind: input, shape index: {}, may-alias: {0,1,2}]
  %s3 = inlined_call_operand.vmem [shape: bf16[3,384,128], index: 3, kind: input, shape index: {}]
  %s4 = inlined_call_operand.vmem [shape: f32[1,128], index: 4, kind: input, shape index: {}]
  %s5 = inlined_call_operand.vmem [shape: bf16[2,8,8,128], index: 5, kind: output, shape index: {}]
  %s6 = sld [smem:[#allocation0]]
  $region53: #{bottleneck_forward.4} parent=0
    _
  %s8 = ssub.s32 1, %s6
  %s9 = scalar_select 0, %s8, %s6
  loop: start=0, step=1, limit=18
  $region2: #{bottleneck_forward.4} parent=0 // loop_pre_header
    _
  $region3: #{bottleneck_forward.4} parent=0 // loop_header
    %s11 = sphi 0, %s15
    %p12 = scmp.ge.s32.totalorder %s11, 18
    %s18 = sphi 0, %s30
    %s19 = sphi 0, %s26
    %s20 = sphi 0, %s18
    %s21 = sphi 0, %s19
    %s22 = sphi 0, %s20
    %s23 = sphi 0, %s21
    %s37 = sphi 0, %s39
    %s40 = sphi 0, %s37
    %s41 = sphi 0, %s40
    %s57 = sphi 0, %s41
    %s69 = sphi 0, %s71
    %s72 = sphi 0, %s69
    %s73 = sphi 0, %s72
    %s89 = sphi 0, %s73
    %s101 = sphi 0, %s103
    %s104 = sphi 0, %s101
    %s105 = sphi 0, %s104
    %s121 = sphi 0, %s105
    %s125 = sphi 0, %s125
    %s127 = sphi 0, %s125
    %s128 = sphi 0, %s127
    %s142 = sphi 0, %s128
    %s146 = sphi 0, %s146
    %s148 = sphi 0, %s146
    %s149 = sphi 0, %s148
    %s163 = sphi 0, %s149
    %s171 = sphi 0, %s173
    %s174 = sphi 0, %s171
    %s175 = sphi 0, %s174
    %s191 = sphi 0, %s175
  $region4: #{bottleneck_forward.4} parent=0 // loop_header_branch
    %14 = sbr.rel (%p12) target = $region8
  $region5: #{bottleneck_forward.4} parent=0 // loop_body
    %s16 = ssub.s32 %s11, 1
    %s17 = ssub.s32 %s11, 2
    %s24 = sadd.s32 1, %s19
    %p25 = scmp.ge.s32.totalorder %s24, 8
    %s26 = scalar_select %p25, 0, %s24
    %s27 = sadd.s32 1, %s18
    %s28 = scalar_select %p25, %s27, %s18
    %p29 = scmp.ge.s32.totalorder %s28, 2
    %s30 = scalar_select %p29, 0, %s28
    %s31 = smul.u32 %s19, 2
    %s32 = smul.u32 %s26, 2
    %s33 = ssub.s32 %s18, %s30
    %s34 = ssub.s32 %s31, %s32
    %s35 = sor.u32 %s33, %s34
    %p36 = scmp.eq.s32.totalorder %s35, 0
    %s38 = sadd.s32 %s37, 1
    %s39 = scalar_select %p36, %s37, %s38
    %p42 = pneg %p36
    %p43 = scmp.eq.s32.totalorder %s11, 15
    %p44 = por %p42, %p43
    %p45 = scmp.ne.s32.totalorder %s37, %s40
    %p46 = scmp.eq.s32.totalorder %s11, 0
    %p47 = por %p45, %p46
    %p48 = scmp.ne.s32.totalorder %s37, %s40
    %p49 = scmp.eq.s32.totalorder %s16, 15
    %p50 = por %p48, %p49
    %p51 = scmp.ne.s32.totalorder %s40, %s41
    %p52 = scmp.eq.s32.totalorder %s16, 0
    %p53 = por %p51, %p52
    %p54 = scmp.ne.s32.totalorder %s40, %s41
    %p55 = scmp.eq.s32.totalorder %s17, 15
    %p56 = por %p54, %p55
    %p58 = scmp.ne.s32.totalorder %s41, %s57
    %p59 = scmp.eq.s32.totalorder %s17, 0
    %p60 = por %p58, %p59
    %s61 = smul.u32 %s19, 2
    %s62 = sadd.s32 %s61, 1
    %s63 = smul.u32 %s26, 2
    %s64 = sadd.s32 %s63, 1
    %s65 = ssub.s32 %s18, %s30
    %s66 = ssub.s32 %s62, %s64
    %s67 = sor.u32 %s65, %s66
    %p68 = scmp.eq.s32.totalorder %s67, 0
    %s70 = sadd.s32 %s69, 1
    %s71 = scalar_select %p68, %s69, %s70
    %p74 = pneg %p68
    %p75 = scmp.eq.s32.totalorder %s11, 15
    %p76 = por %p74, %p75
    %p77 = scmp.ne.s32.totalorder %s69, %s72
    %p78 = scmp.eq.s32.totalorder %s11, 0
    %p79 = por %p77, %p78
    %p80 = scmp.ne.s32.totalorder %s69, %s72
    %p81 = scmp.eq.s32.totalorder %s16, 15
    %p82 = por %p80, %p81
    %p83 = scmp.ne.s32.totalorder %s72, %s73
    %p84 = scmp.eq.s32.totalorder %s16, 0
    %p85 = por %p83, %p84
    %p86 = scmp.ne.s32.totalorder %s72, %s73
    %p87 = scmp.eq.s32.totalorder %s17, 15
    %p88 = por %p86, %p87
    %p90 = scmp.ne.s32.totalorder %s73, %s89
    %p91 = scmp.eq.s32.totalorder %s17, 0
    %p92 = por %p90, %p91
    %s93 = smul.u32 %s19, 2
    %s94 = sadd.s32 %s93, 2
    %s95 = smul.u32 %s26, 2
    %s96 = sadd.s32 %s95, 2
    %s97 = ssub.s32 %s18, %s30
    %s98 = ssub.s32 %s94, %s96
    %s99 = sor.u32 %s97, %s98
    %p100 = scmp.eq.s32.totalorder %s99, 0
    %s102 = sadd.s32 %s101, 1
    %s103 = scalar_select %p100, %s101, %s102
    %p106 = pneg %p100
    %p107 = scmp.eq.s32.totalorder %s11, 15
    %p108 = por %p106, %p107
    %p109 = scmp.ne.s32.totalorder %s101, %s104
    %p110 = scmp.eq.s32.totalorder %s11, 0
    %p111 = por %p109, %p110
    %p112 = scmp.ne.s32.totalorder %s101, %s104
    %p113 = scmp.eq.s32.totalorder %s16, 15
    %p114 = por %p112, %p113
    %p115 = scmp.ne.s32.totalorder %s104, %s105
    %p116 = scmp.eq.s32.totalorder %s16, 0
    %p117 = por %p115, %p116
    %p118 = scmp.ne.s32.totalorder %s104, %s105
    %p119 = scmp.eq.s32.totalorder %s17, 15
    %p120 = por %p118, %p119
    %p122 = scmp.ne.s32.totalorder %s105, %s121
    %p123 = scmp.eq.s32.totalorder %s17, 0
    %p124 = por %p122, %p123
    %s126 = sadd.s32 %s125, 1
    %p129 = scmp.eq.s32.totalorder %s11, 15
    %p130 = scmp.ne.s32.totalorder %s125, %s127
    %p131 = scmp.eq.s32.totalorder %s11, 0
    %p132 = por %p130, %p131
    %p133 = scmp.ne.s32.totalorder %s125, %s127
    %p134 = scmp.eq.s32.totalorder %s16, 15
    %p135 = por %p133, %p134
    %p136 = scmp.ne.s32.totalorder %s127, %s128
    %p137 = scmp.eq.s32.totalorder %s16, 0
    %p138 = por %p136, %p137
    %p139 = scmp.ne.s32.totalorder %s127, %s128
    %p140 = scmp.eq.s32.totalorder %s17, 15
    %p141 = por %p139, %p140
    %p143 = scmp.ne.s32.totalorder %s128, %s142
    %p144 = scmp.eq.s32.totalorder %s17, 0
    %p145 = por %p143, %p144
    %s147 = sadd.s32 %s146, 1
    %p150 = scmp.eq.s32.totalorder %s11, 15
    %p151 = scmp.ne.s32.totalorder %s146, %s148
    %p152 = scmp.eq.s32.totalorder %s11, 0
    %p153 = por %p151, %p152
    %p154 = scmp.ne.s32.totalorder %s146, %s148
    %p155 = scmp.eq.s32.totalorder %s16, 15
    %p156 = por %p154, %p155
    %p157 = scmp.ne.s32.totalorder %s148, %s149
    %p158 = scmp.eq.s32.totalorder %s16, 0
    %p159 = por %p157, %p158
    %p160 = scmp.ne.s32.totalorder %s148, %s149
    %p161 = scmp.eq.s32.totalorder %s17, 15
    %p162 = por %p160, %p161
    %p164 = scmp.ne.s32.totalorder %s149, %s163
    %p165 = scmp.eq.s32.totalorder %s17, 0
    %p166 = por %p164, %p165
    %s167 = ssub.s32 %s18, %s30
    %s168 = ssub.s32 %s19, %s26
    %s169 = sor.u32 %s167, %s168
    %p170 = scmp.eq.s32.totalorder %s169, 0
    %s172 = sadd.s32 %s171, 1
    %s173 = scalar_select %p170, %s171, %s172
    %p176 = pneg %p170
    %p177 = scmp.eq.s32.totalorder %s11, 15
    %p178 = por %p176, %p177
    %p179 = scmp.ne.s32.totalorder %s171, %s174
    %p180 = scmp.eq.s32.totalorder %s11, 0
    %p181 = por %p179, %p180
    %p182 = scmp.ne.s32.totalorder %s171, %s174
    %p183 = scmp.eq.s32.totalorder %s16, 15
    %p184 = por %p182, %p183
    %p185 = scmp.ne.s32.totalorder %s174, %s175
    %p186 = scmp.eq.s32.totalorder %s16, 0
    %p187 = por %p185, %p186
    %p188 = scmp.ne.s32.totalorder %s174, %s175
    %p189 = scmp.eq.s32.totalorder %s17, 15
    %p190 = por %p188, %p189
    %p192 = scmp.ne.s32.totalorder %s175, %s191
    %p193 = scmp.eq.s32.totalorder %s17, 0
    %p194 = por %p192, %p193
    %p195 = scmp.le.s32.totalorder 1, %s11
    %p196 = scmp.lt.s32.totalorder %s11, 17
    %p197 = pnand %p195, %p196
    %p198 = pneg %p197
    // Predicated region
    $region9: #{bottleneck_forward.4} parent=5 // pred_check
      _
    $region10: #{bottleneck_forward.4} parent=5 // pred_check_branch
      %200 = sbr.rel (%p197) target = $region12
    $region11: #{bottleneck_forward.4} parent=5 // pred_region
      %s201 = ssub.s32 %s11, 1
      // Predicated region
      $region13: #{bottleneck_forward.4} parent=11 // pred_check
        %p202 = pneg %p138
      $region14: #{bottleneck_forward.4} parent=11 // pred_check_branch
        %204 = sbr.rel (%p202) target = $region16
      $region15: #{bottleneck_forward.4} parent=11 // pred_region
        _
      $region16: #{bottleneck_forward.4} parent=11 // pred_fallthru
        _
      // Predicated region
      $region17: #{bottleneck_forward.4} parent=11 // pred_check
        %p205 = pneg %p159
      $region18: #{bottleneck_forward.4} parent=11 // pred_check_branch
        %207 = sbr.rel (%p205) target = $region20
      $region19: #{bottleneck_forward.4} parent=11 // pred_region
        _
      $region20: #{bottleneck_forward.4} parent=11 // pred_fallthru
        _
    $region12: #{bottleneck_forward.4} parent=5 // pred_fallthru
      _
    %p208 = scmp.lt.s32.totalorder %s11, 16
    // Predicated region
    $region21: #{bottleneck_forward.4} parent=5 // pred_check
      %p209 = pneg %p208
    $region22: #{bottleneck_forward.4} parent=5 // pred_check_branch
      %211 = sbr.rel (%p209) target = $region24
    $region23: #{bottleneck_forward.4} parent=5 // pred_region
      // Predicated region
      $region25: #{bottleneck_forward.4} parent=23 // pred_check
        %p212 = pneg %p47
      $region26: #{bottleneck_forward.4} parent=23 // pred_check_branch
        %214 = sbr.rel (%p212) target = $region28
      $region27: #{bottleneck_forward.4} parent=23 // pred_region
        %s215 = smul.u32 %s19, 2
        %p216 = scmp.lt.s32.totalorder %s18, 1
        %s217 = scalar_select %p216, %s18, 1
        %p218 = scmp.lt.s32.totalorder %s215, 17
        %s219 = scalar_select %p218, %s215, 17
        %s220 = smul.addr %s219, 3
        %s221 = smul.addr %s217, 54
        %s222 = sadd.s32 %s220, %s221
        %s223 = smul.addr %s222, 4
        %s224 = scalar_lea.vmem %s0, %s223
        %s225 = smul.u32 %s19, 2
      $region28: #{bottleneck_forward.4} parent=23 // pred_fallthru
        _
      // Predicated region
      $region29: #{bottleneck_forward.4} parent=23 // pred_check
        %p226 = pneg %p79
      $region30: #{bottleneck_forward.4} parent=23 // pred_check_branch
        %228 = sbr.rel (%p226) target = $region32
      $region31: #{bottleneck_forward.4} parent=23 // pred_region
        %s229 = smul.u32 %s19, 2
        %s230 = sadd.s32 %s229, 1
        %p231 = scmp.lt.s32.totalorder %s18, 1
        %s232 = scalar_select %p231, %s18, 1
        %p233 = scmp.lt.s32.totalorder %s230, 17
        %s234 = scalar_select %p233, %s230, 17
        %s235 = smul.addr %s234, 3
        %s236 = smul.addr %s232, 54
        %s237 = sadd.s32 %s235, %s236
        %s238 = smul.addr %s237, 4
        %s239 = scalar_lea.vmem %s1, %s238
        %s240 = smul.u32 %s19, 2
        %s241 = sadd.s32 %s240, 1
      $region32: #{bottleneck_forward.4} parent=23 // pred_fallthru
        _
      // Predicated region
      $region33: #{bottleneck_forward.4} parent=23 // pred_check
        %p242 = pneg %p111
      $region34: #{bottleneck_forward.4} parent=23 // pred_check_branch
        %244 = sbr.rel (%p242) target = $region36
      $region35: #{bottleneck_forward.4} parent=23 // pred_region
        %s245 = smul.u32 %s19, 2
        %s246 = sadd.s32 %s245, 2
        %p247 = scmp.lt.s32.totalorder %s18, 1
        %s248 = scalar_select %p247, %s18, 1
        %p249 = scmp.lt.s32.totalorder %s246, 17
        %s250 = scalar_select %p249, %s246, 17
        %s251 = smul.addr %s250, 3
        %s252 = smul.addr %s248, 54
        %s253 = sadd.s32 %s251, %s252
        %s254 = smul.addr %s253, 4
        %s255 = scalar_lea.vmem %s2, %s254
        %s256 = smul.u32 %s19, 2
        %s257 = sadd.s32 %s256, 2
      $region36: #{bottleneck_forward.4} parent=23 // pred_fallthru
        _
    $region24: #{bottleneck_forward.4} parent=5 // pred_fallthru
      _
    %p258 = scmp.le.s32.totalorder 1, %s11
    %p259 = scmp.lt.s32.totalorder %s11, 17
    %p260 = pnand %p258, %p259
    %p261 = pneg %p260
    // Predicated region
    $region37: #{bottleneck_forward.4} parent=5 // pred_check
      _
    $region38: #{bottleneck_forward.4} parent=5 // pred_check_branch
      %263 = sbr.rel (%p260) target = $region40
    $region39: #{bottleneck_forward.4} parent=5 // pred_region
      %s264 = ssub.s32 %s11, 1
      %s265 = smul.u32 %s21, 2
      %p266 = scmp.lt.s32.totalorder %s20, 1
      %s267 = scalar_select %p266, %s20, 1
      %p268 = scmp.lt.s32.totalorder %s265, 17
      %s269 = scalar_select %p268, %s265, 17
      %s270 = smul.addr %s269, 3
      %s271 = smul.addr %s267, 54
      %s272 = sadd.s32 %s270, %s271
      %s273 = smul.addr %s272, 4
      %s274 = scalar_lea.vmem %s0, %s273
      %p275 = pneg %p53
      %p276 = pneg %p50
      %s277 = smul.u32 %s21, 2
      %s278 = sadd.s32 %s277, 1
      %p279 = scmp.lt.s32.totalorder %s20, 1
      %s280 = scalar_select %p279, %s20, 1
      %p281 = scmp.lt.s32.totalorder %s278, 17
      %s282 = scalar_select %p281, %s278, 17
      %s283 = smul.addr %s282, 3
      %s284 = smul.addr %s280, 54
      %s285 = sadd.s32 %s283, %s284
      %s286 = smul.addr %s285, 4
      %s287 = scalar_lea.vmem %s1, %s286
      %p288 = pneg %p85
      %p289 = pneg %p82
      %s290 = smul.u32 %s21, 2
      %s291 = sadd.s32 %s290, 2
      %p292 = scmp.lt.s32.totalorder %s20, 1
      %s293 = scalar_select %p292, %s20, 1
      %p294 = scmp.lt.s32.totalorder %s291, 17
      %s295 = scalar_select %p294, %s291, 17
      %s296 = smul.addr %s295, 3
      %s297 = smul.addr %s293, 54
      %s298 = sadd.s32 %s296, %s297
      %s299 = smul.addr %s298, 4
      %s300 = scalar_lea.vmem %s2, %s299
      %p301 = pneg %p117
      %p302 = pneg %p114
      %p303 = pneg %p138
      %p304 = pneg %p135
      %p305 = pneg %p159
      %p306 = pneg %p156
      %p307 = pneg %p187
      %p308 = pneg %p184
      %p309 = scmp.lt.s32.totalorder %s20, 1
      %s310 = scalar_select %p309, %s20, 1
      %p311 = scmp.lt.s32.totalorder %s21, 7
      %s312 = scalar_select %p311, %s21, 7
      %s313 = smul.addr %s310, 8
      %s314 = sadd.s32 %s312, %s313
      %s315 = smul.addr %s314, 4
      %s316 = scalar_lea.vmem %s5, %s315
      %s317 = smul.u32 %s21, 2
      %p318 = scmp.lt.s32.totalorder %s20, 1
      %s319 = scalar_select %p318, %s20, 1
      %p320 = scmp.lt.s32.totalorder %s317, 17
      %s321 = scalar_select %p320, %s317, 17
      %s322 = smul.addr %s321, 3
      %s323 = smul.addr %s319, 54
      %s324 = sadd.s32 %s322, %s323
      %s325 = smul.addr %s324, 4
      %s326 = scalar_lea.vmem %s0, %s325
      %s327 = smul.u32 %s21, 2
      %s328 = smul.u32 %s21, 2
      %s329 = sadd.s32 %s328, 1
      %p330 = scmp.lt.s32.totalorder %s20, 1
      %s331 = scalar_select %p330, %s20, 1
      %p332 = scmp.lt.s32.totalorder %s329, 17
      %s333 = scalar_select %p332, %s329, 17
      %s334 = smul.addr %s333, 3
      %s335 = smul.addr %s331, 54
      %s336 = sadd.s32 %s334, %s335
      %s337 = smul.addr %s336, 4
      %s338 = scalar_lea.vmem %s1, %s337
      %s339 = smul.u32 %s21, 2
      %s340 = sadd.s32 %s339, 1
      %s341 = smul.u32 %s21, 2
      %s342 = sadd.s32 %s341, 2
      %p343 = scmp.lt.s32.totalorder %s20, 1
      %s344 = scalar_select %p343, %s20, 1
      %p345 = scmp.lt.s32.totalorder %s342, 17
      %s346 = scalar_select %p345, %s342, 17
      %s347 = smul.addr %s346, 3
      %s348 = smul.addr %s344, 54
      %s349 = sadd.s32 %s347, %s348
      %s350 = smul.addr %s349, 4
      %s351 = scalar_lea.vmem %s2, %s350
      %s352 = smul.u32 %s21, 2
      %s353 = sadd.s32 %s352, 2
      %p354 = scmp.lt.s32.totalorder %s20, 1
      %s355 = scalar_select %p354, %s20, 1
      %p356 = scmp.lt.s32.totalorder %s21, 7
      %s357 = scalar_select %p356, %s21, 7
      %s358 = smul.addr %s355, 8
      %s359 = sadd.s32 %s357, %s358
      %s360 = smul.addr %s359, 4
      %s361 = scalar_lea.vmem %s5, %s360
      %v363 = vld [vmem:[%s326] sm:$0xff]
      %v364 = vld [vmem:[%s326 + $0x8] sm:$0xf]
      %v365 = vld [vmem:[%s3] sm:$0xf]
      %v366 = vld [vmem:[%s3 + $0x4] sm:$0xf]
      %v367 = vld [vmem:[%s3 + $0x8] sm:$0xf]
      %v368 = vld [vmem:[%s3 + $0xc] sm:$0xf]
      %v369 = vld [vmem:[%s3 + $0x10] sm:$0xf]
      %v370 = vld [vmem:[%s3 + $0x14] sm:$0xf]
      %v371 = vld [vmem:[%s3 + $0x18] sm:$0xf]
      %v372 = vld [vmem:[%s3 + $0x1c] sm:$0xf]
      %v373 = vld [vmem:[%s3 + $0x20] sm:$0xf]
      %v374 = vld [vmem:[%s3 + $0x24] sm:$0xf]
      %v375 = vld [vmem:[%s3 + $0x28] sm:$0xf]
      %v376 = vld [vmem:[%s3 + $0x2c] sm:$0xf]
      %v377 = vld [vmem:[%s3 + $0x30] sm:$0xf]
      %v378 = vld [vmem:[%s3 + $0x34] sm:$0xf]
      %v379 = vld [vmem:[%s3 + $0x38] sm:$0xf]
      %v380 = vld [vmem:[%s3 + $0x3c] sm:$0xf]
      %v381 = vld [vmem:[%s3 + $0x40] sm:$0xf]
      %v382 = vld [vmem:[%s3 + $0x44] sm:$0xf]
      %v383 = vld [vmem:[%s3 + $0x48] sm:$0xf]
      %v384 = vld [vmem:[%s3 + $0x4c] sm:$0xf]
      %v385 = vld [vmem:[%s3 + $0x50] sm:$0xf]
      %v386 = vld [vmem:[%s3 + $0x54] sm:$0xf]
      %v387 = vld [vmem:[%s3 + $0x58] sm:$0xf]
      %v388 = vld [vmem:[%s3 + $0x5c] sm:$0xf]
      %v389 = vld [vmem:[%s3 + $0x60] sm:$0xf]
      %v390 = vld [vmem:[%s3 + $0x64] sm:$0xf]
      %v391 = vld [vmem:[%s3 + $0x68] sm:$0xf]
      %v392 = vld [vmem:[%s3 + $0x6c] sm:$0xf]
      %v393 = vld [vmem:[%s3 + $0x70] sm:$0xf]
      %v394 = vld [vmem:[%s3 + $0x74] sm:$0xf]
      %v395 = vld [vmem:[%s3 + $0x78] sm:$0xf]
      %v396 = vld [vmem:[%s3 + $0x7c] sm:$0xf]
      %v397 = vld [vmem:[%s3 + $0x80] sm:$0xf]
      %v398 = vld [vmem:[%s3 + $0x84] sm:$0xf]
      %v399 = vld [vmem:[%s3 + $0x88] sm:$0xf]
      %v400 = vld [vmem:[%s3 + $0x8c] sm:$0xf]
      %v401 = vld [vmem:[%s3 + $0x90] sm:$0xf]
      %v402 = vld [vmem:[%s3 + $0x94] sm:$0xf]
      %v403 = vld [vmem:[%s3 + $0x98] sm:$0xf]
      %v404 = vld [vmem:[%s3 + $0x9c] sm:$0xf]
      %v405 = vld [vmem:[%s3 + $0xa0] sm:$0xf]
      %v406 = vld [vmem:[%s3 + $0xa4] sm:$0xf]
      %v407 = vld [vmem:[%s3 + $0xa8] sm:$0xf]
      %v408 = vld [vmem:[%s3 + $0xac] sm:$0xf]
      %v409 = vld [vmem:[%s3 + $0xb0] sm:$0xf]
      %v410 = vld [vmem:[%s3 + $0xb4] sm:$0xf]
      %v411 = vld [vmem:[%s3 + $0xb8] sm:$0xf]
      %v412 = vld [vmem:[%s3 + $0xbc] sm:$0xf]
      %v413 = vld [vmem:[%s338] sm:$0xff]
      %v414 = vld [vmem:[%s338 + $0x8] sm:$0xf]
      %s415 = scalar_lea.vmem %s3, 192
      %v416 = vld [vmem:[%s415] sm:$0xf]
      %v417 = vld [vmem:[%s415 + $0x4] sm:$0xf]
      %v418 = vld [vmem:[%s415 + $0x8] sm:$0xf]
      %v419 = vld [vmem:[%s415 + $0xc] sm:$0xf]
      %v420 = vld [vmem:[%s415 + $0x10] sm:$0xf]
      %v421 = vld [vmem:[%s415 + $0x14] sm:$0xf]
      %v422 = vld [vmem:[%s415 + $0x18] sm:$0xf]
      %v423 = vld [vmem:[%s415 + $0x1c] sm:$0xf]
      %v424 = vld [vmem:[%s415 + $0x20] sm:$0xf]
      %v425 = vld [vmem:[%s415 + $0x24] sm:$0xf]
      %v426 = vld [vmem:[%s415 + $0x28] sm:$0xf]
      %v427 = vld [vmem:[%s415 + $0x2c] sm:$0xf]
      %v428 = vld [vmem:[%s415 + $0x30] sm:$0xf]
      %v429 = vld [vmem:[%s415 + $0x34] sm:$0xf]
      %v430 = vld [vmem:[%s415 + $0x38] sm:$0xf]
      %v431 = vld [vmem:[%s415 + $0x3c] sm:$0xf]
      %v432 = vld [vmem:[%s415 + $0x40] sm:$0xf]
      %v433 = vld [vmem:[%s415 + $0x44] sm:$0xf]
      %v434 = vld [vmem:[%s415 + $0x48] sm:$0xf]
      %v435 = vld [vmem:[%s415 + $0x4c] sm:$0xf]
      %v436 = vld [vmem:[%s415 + $0x50] sm:$0xf]
      %v437 = vld [vmem:[%s415 + $0x54] sm:$0xf]
      %v438 = vld [vmem:[%s415 + $0x58] sm:$0xf]
      %v439 = vld [vmem:[%s415 + $0x5c] sm:$0xf]
      %v440 = vld [vmem:[%s415 + $0x60] sm:$0xf]
      %v441 = vld [vmem:[%s415 + $0x64] sm:$0xf]
      %v442 = vld [vmem:[%s415 + $0x68] sm:$0xf]
      %v443 = vld [vmem:[%s415 + $0x6c] sm:$0xf]
      %v444 = vld [vmem:[%s415 + $0x70] sm:$0xf]
      %v445 = vld [vmem:[%s415 + $0x74] sm:$0xf]
      %v446 = vld [vmem:[%s415 + $0x78] sm:$0xf]
      %v447 = vld [vmem:[%s415 + $0x7c] sm:$0xf]
      %v448 = vld [vmem:[%s415 + $0x80] sm:$0xf]
      %v449 = vld [vmem:[%s415 + $0x84] sm:$0xf]
      %v450 = vld [vmem:[%s415 + $0x88] sm:$0xf]
      %v451 = vld [vmem:[%s415 + $0x8c] sm:$0xf]
      %v452 = vld [vmem:[%s415 + $0x90] sm:$0xf]
      %v453 = vld [vmem:[%s415 + $0x94] sm:$0xf]
      %v454 = vld [vmem:[%s415 + $0x98] sm:$0xf]
      %v455 = vld [vmem:[%s415 + $0x9c] sm:$0xf]
      %v456 = vld [vmem:[%s415 + $0xa0] sm:$0xf]
      %v457 = vld [vmem:[%s415 + $0xa4] sm:$0xf]
      %v458 = vld [vmem:[%s415 + $0xa8] sm:$0xf]
      %v459 = vld [vmem:[%s415 + $0xac] sm:$0xf]
      %v460 = vld [vmem:[%s415 + $0xb0] sm:$0xf]
      %v461 = vld [vmem:[%s415 + $0xb4] sm:$0xf]
      %v462 = vld [vmem:[%s415 + $0xb8] sm:$0xf]
      %v463 = vld [vmem:[%s415 + $0xbc] sm:$0xf]
      %v466 = vunpack.c.l.b16 %v413
      %v467 = vunpack.c.h.b16 %v413
      %v468 = vunpack.c.l.b16 %v414
      %v469 = vpack.c.b16 %v466, %v466
      %v470 = vpack.c.b16 %v467, %v467
      %v471 = vpack.c.b16 %v468, %v468
      %v523 = vunpack.c.l.b16 %v416
      %v524 = vunpack.c.l.b16 %v417
      %v525 = vunpack.c.l.b16 %v418
      %v526 = vunpack.c.l.b16 %v419
      %v527 = vunpack.c.l.b16 %v420
      %v528 = vunpack.c.l.b16 %v421
      %v529 = vunpack.c.l.b16 %v422
      %v530 = vunpack.c.l.b16 %v423
      %v531 = vunpack.c.l.b16 %v424
      %v532 = vunpack.c.l.b16 %v425
      %v533 = vunpack.c.l.b16 %v426
      %v534 = vunpack.c.l.b16 %v427
      %v535 = vunpack.c.l.b16 %v428
      %v536 = vunpack.c.l.b16 %v429
      %v537 = vunpack.c.l.b16 %v430
      %v538 = vunpack.c.l.b16 %v431
      %v539 = vunpack.c.l.b16 %v432
      %v540 = vunpack.c.l.b16 %v433
      %v541 = vunpack.c.l.b16 %v434
      %v542 = vunpack.c.l.b16 %v435
      %v543 = vunpack.c.l.b16 %v436
      %v544 = vunpack.c.l.b16 %v437
      %v545 = vunpack.c.l.b16 %v438
      %v546 = vunpack.c.l.b16 %v439
      %v547 = vunpack.c.l.b16 %v440
      %v548 = vunpack.c.l.b16 %v441
      %v549 = vunpack.c.l.b16 %v442
      %v550 = vunpack.c.l.b16 %v443
      %v551 = vunpack.c.l.b16 %v444
      %v552 = vunpack.c.l.b16 %v445
      %v553 = vunpack.c.l.b16 %v446
      %v554 = vunpack.c.l.b16 %v447
      %v555 = vunpack.c.l.b16 %v448
      %v556 = vunpack.c.l.b16 %v449
      %v557 = vunpack.c.l.b16 %v450
      %v558 = vunpack.c.l.b16 %v451
      %v559 = vunpack.c.l.b16 %v452
      %v560 = vunpack.c.l.b16 %v453
      %v561 = vunpack.c.l.b16 %v454
      %v562 = vunpack.c.l.b16 %v455
      %v563 = vunpack.c.l.b16 %v456
      %v564 = vunpack.c.l.b16 %v457
      %v565 = vunpack.c.l.b16 %v458
      %v566 = vunpack.c.l.b16 %v459
      %v567 = vunpack.c.l.b16 %v460
      %v568 = vunpack.c.l.b16 %v461
      %v569 = vunpack.c.l.b16 %v462
      %v570 = vunpack.c.l.b16 %v463
      %v571 = vpack.c.b16 %v524, %v523
      %v572 = vpack.c.b16 %v526, %v525
      %v573 = vpack.c.b16 %v528, %v527
      %v574 = vpack.c.b16 %v530, %v529
      %v575 = vpack.c.b16 %v532, %v531
      %v576 = vpack.c.b16 %v534, %v533
      %v577 = vpack.c.b16 %v536, %v535
      %v578 = vpack.c.b16 %v538, %v537
      %v579 = vpack.c.b16 %v540, %v539
      %v580 = vpack.c.b16 %v542, %v541
      %v581 = vpack.c.b16 %v544, %v543
      %v582 = vpack.c.b16 %v546, %v545
      %v583 = vpack.c.b16 %v548, %v547
      %v584 = vpack.c.b16 %v550, %v549
      %v585 = vpack.c.b16 %v552, %v551
      %v586 = vpack.c.b16 %v554, %v553
      %v587 = vpack.c.b16 %v556, %v555
      %v588 = vpack.c.b16 %v558, %v557
      %v589 = vpack.c.b16 %v560, %v559
      %v590 = vpack.c.b16 %v562, %v561
      %v591 = vpack.c.b16 %v564, %v563
      %v592 = vpack.c.b16 %v566, %v565
      %v593 = vpack.c.b16 %v568, %v567
      %v594 = vpack.c.b16 %v570, %v569
      %619 = vmatprep.subr.bf16.mxu0 0
      %620 = vmatpush1.bf16.msra.mxu0 %v578
      %621 = vmatprep.subr.bf16.mxu0 0
      %622 = vmatpush1.bf16.msra.mxu0 %v577
      %623 = vmatprep.subr.bf16.mxu0 0
      %624 = vmatpush1.bf16.msra.mxu0 %v576
      %625 = vmatprep.subr.bf16.mxu0 0
      %626 = vmatpush1.bf16.msra.mxu0 %v575
      %627 = vmatprep.subr.bf16.mxu0 0
      %628 = vmatpush1.bf16.msra.mxu0 %v574
      %629 = vmatprep.subr.bf16.mxu0 0
      %630 = vmatpush1.bf16.msra.mxu0 %v573
      %631 = vmatprep.subr.bf16.mxu0 0
      %632 = vmatpush1.bf16.msra.mxu0 %v572
      %633 = vmatprep.subr.bf16.mxu0 0
      %634 = vmatpush1.bf16.msra.mxu0 %v571
      %635 = vmatprep.subr.bf16.mxu0 0
      %636 = vmatpush2.bf16.msra.mxu0 %v586
      %637 = vmatprep.subr.bf16.mxu0 0
      %638 = vmatpush2.bf16.msra.mxu0 %v585
      %639 = vmatprep.subr.bf16.mxu0 0
      %640 = vmatpush2.bf16.msra.mxu0 %v584
      %641 = vmatprep.subr.bf16.mxu0 0
      %642 = vmatpush2.bf16.msra.mxu0 %v583
      %643 = vmatprep.subr.bf16.mxu0 0
      %644 = vmatpush2.bf16.msra.mxu0 %v582
      %645 = vmatprep.subr.bf16.mxu0 0
      %646 = vmatpush2.bf16.msra.mxu0 %v581
      %647 = vmatprep.subr.bf16.mxu0 0
      %648 = vmatpush2.bf16.msra.mxu0 %v580
      %649 = vmatprep.subr.bf16.mxu0 0
      %650 = vmatpush2.bf16.msra.mxu0 %v579
      %651 = vmatprep.mubr.bf16.mxu0 %v470
      %652 = vmatmul.mubr.bf16.gmra.mxu0 %v469
      %v653 = vpop.f32.mrf.mxu0
      %v654 = vadd.f32 0.0, %v653
      %v655 = vpop.f32.mrf.mxu0
      %v656 = vpop.f32.mrf.mxu0
      %v657 = vpop.f32.mrf.mxu0
      %658 = vdwg.mxu0
      %659 = vmatprep.subr.bf16.mxu0 0
      %660 = vmatpush1.bf16.msra.mxu0 %v594
      %661 = vmatprep.subr.bf16.mxu0 0
      %662 = vmatpush1.bf16.msra.mxu0 %v593
      %663 = vmatprep.subr.bf16.mxu0 0
      %664 = vmatpush1.bf16.msra.mxu0 %v592
      %665 = vmatprep.subr.bf16.mxu0 0
      %666 = vmatpush1.bf16.msra.mxu0 %v591
      %667 = vmatprep.subr.bf16.mxu0 0
      %668 = vmatpush1.bf16.msra.mxu0 %v590
      %669 = vmatprep.subr.bf16.mxu0 0
      %670 = vmatpush1.bf16.msra.mxu0 %v589
      %671 = vmatprep.subr.bf16.mxu0 0
      %672 = vmatpush1.bf16.msra.mxu0 %v588
      %673 = vmatprep.subr.bf16.mxu0 0
      %674 = vmatpush1.bf16.msra.mxu0 %v587
      %675 = vmatprep.subr.bf16.mxu0 0
      %676 = vmatpush2.bf16.msra.mxu0 0
      %677 = vmatprep.subr.bf16.mxu0 0
      %678 = vmatpush2.bf16.msra.mxu0 0
      %679 = vmatprep.subr.bf16.mxu0 0
      %680 = vmatpush2.bf16.msra.mxu0 0
      %681 = vmatprep.subr.bf16.mxu0 0
      %682 = vmatpush2.bf16.msra.mxu0 0
      %683 = vmatprep.subr.bf16.mxu0 0
      %684 = vmatpush2.bf16.msra.mxu0 0
      %685 = vmatprep.subr.bf16.mxu0 0
      %686 = vmatpush2.bf16.msra.mxu0 0
      %687 = vmatprep.subr.bf16.mxu0 0
      %688 = vmatpush2.bf16.msra.mxu0 0
      %689 = vmatprep.subr.bf16.mxu0 0
      %690 = vmatpush2.bf16.msra.mxu0 0
      %691 = vmatprep.mubr.bf16.mxu0 0
      %692 = vmatmul.mubr.bf16.gmra.mxu0 %v471
      %v693 = vpop.f32.mrf.mxu0
      %v694 = vadd.f32 %v654, %v693
      %v695 = vpop.f32.mrf.mxu0
      %v696 = vpop.f32.mrf.mxu0
      %v697 = vpop.f32.mrf.mxu0
      %698 = vdwg.mxu0
      %v701 = vunpack.c.l.b16 %v363
      %v702 = vunpack.c.h.b16 %v363
      %v703 = vunpack.c.l.b16 %v364
      %v704 = vpack.c.b16 %v701, %v701
      %v705 = vpack.c.b16 %v702, %v702
      %v706 = vpack.c.b16 %v703, %v703
      %v758 = vunpack.c.l.b16 %v365
      %v759 = vunpack.c.l.b16 %v366
      %v760 = vunpack.c.l.b16 %v367
      %v761 = vunpack.c.l.b16 %v368
      %v762 = vunpack.c.l.b16 %v369
      %v763 = vunpack.c.l.b16 %v370
      %v764 = vunpack.c.l.b16 %v371
      %v765 = vunpack.c.l.b16 %v372
      %v766 = vunpack.c.l.b16 %v373
      %v767 = vunpack.c.l.b16 %v374
      %v768 = vunpack.c.l.b16 %v375
      %v769 = vunpack.c.l.b16 %v376
      %v770 = vunpack.c.l.b16 %v377
      %v771 = vunpack.c.l.b16 %v378
      %v772 = vunpack.c.l.b16 %v379
      %v773 = vunpack.c.l.b16 %v380
      %v774 = vunpack.c.l.b16 %v381
      %v775 = vunpack.c.l.b16 %v382
      %v776 = vunpack.c.l.b16 %v383
      %v777 = vunpack.c.l.b16 %v384
      %v778 = vunpack.c.l.b16 %v385
      %v779 = vunpack.c.l.b16 %v386
      %v780 = vunpack.c.l.b16 %v387
      %v781 = vunpack.c.l.b16 %v388
      %v782 = vunpack.c.l.b16 %v389
      %v783 = vunpack.c.l.b16 %v390
      %v784 = vunpack.c.l.b16 %v391
      %v785 = vunpack.c.l.b16 %v392
      %v786 = vunpack.c.l.b16 %v393
      %v787 = vunpack.c.l.b16 %v394
      %v788 = vunpack.c.l.b16 %v395
      %v789 = vunpack.c.l.b16 %v396
      %v790 = vunpack.c.l.b16 %v397
      %v791 = vunpack.c.l.b16 %v398
      %v792 = vunpack.c.l.b16 %v399
      %v793 = vunpack.c.l.b16 %v400
      %v794 = vunpack.c.l.b16 %v401
      %v795 = vunpack.c.l.b16 %v402
      %v796 = vunpack.c.l.b16 %v403
      %v797 = vunpack.c.l.b16 %v404
      %v798 = vunpack.c.l.b16 %v405
      %v799 = vunpack.c.l.b16 %v406
      %v800 = vunpack.c.l.b16 %v407
      %v801 = vunpack.c.l.b16 %v408
      %v802 = vunpack.c.l.b16 %v409
      %v803 = vunpack.c.l.b16 %v410
      %v804 = vunpack.c.l.b16 %v411
      %v805 = vunpack.c.l.b16 %v412
      %v806 = vpack.c.b16 %v759, %v758
      %v807 = vpack.c.b16 %v761, %v760
      %v808 = vpack.c.b16 %v763, %v762
      %v809 = vpack.c.b16 %v765, %v764
      %v810 = vpack.c.b16 %v767, %v766
      %v811 = vpack.c.b16 %v769, %v768
      %v812 = vpack.c.b16 %v771, %v770
      %v813 = vpack.c.b16 %v773, %v772
      %v814 = vpack.c.b16 %v775, %v774
      %v815 = vpack.c.b16 %v777, %v776
      %v816 = vpack.c.b16 %v779, %v778
      %v817 = vpack.c.b16 %v781, %v780
      %v818 = vpack.c.b16 %v783, %v782
      %v819 = vpack.c.b16 %v785, %v784
      %v820 = vpack.c.b16 %v787, %v786
      %v821 = vpack.c.b16 %v789, %v788
      %v822 = vpack.c.b16 %v791, %v790
      %v823 = vpack.c.b16 %v793, %v792
      %v824 = vpack.c.b16 %v795, %v794
      %v825 = vpack.c.b16 %v797, %v796
      %v826 = vpack.c.b16 %v799, %v798
      %v827 = vpack.c.b16 %v801, %v800
      %v828 = vpack.c.b16 %v803, %v802
      %v829 = vpack.c.b16 %v805, %v804
      %854 = vmatprep.subr.bf16.mxu0 0
      %855 = vmatpush1.bf16.msra.mxu0 %v813
      %856 = vmatprep.subr.bf16.mxu0 0
      %857 = vmatpush1.bf16.msra.mxu0 %v812
      %858 = vmatprep.subr.bf16.mxu0 0
      %859 = vmatpush1.bf16.msra.mxu0 %v811
      %860 = vmatprep.subr.bf16.mxu0 0
      %861 = vmatpush1.bf16.msra.mxu0 %v810
      %862 = vmatprep.subr.bf16.mxu0 0
      %863 = vmatpush1.bf16.msra.mxu0 %v809
      %864 = vmatprep.subr.bf16.mxu0 0
      %865 = vmatpush1.bf16.msra.mxu0 %v808
      %866 = vmatprep.subr.bf16.mxu0 0
      %867 = vmatpush1.bf16.msra.mxu0 %v807
      %868 = vmatprep.subr.bf16.mxu0 0
      %869 = vmatpush1.bf16.msra.mxu0 %v806
      %870 = vmatprep.subr.bf16.mxu0 0
      %871 = vmatpush2.bf16.msra.mxu0 %v821
      %872 = vmatprep.subr.bf16.mxu0 0
      %873 = vmatpush2.bf16.msra.mxu0 %v820
      %874 = vmatprep.subr.bf16.mxu0 0
      %875 = vmatpush2.bf16.msra.mxu0 %v819
      %876 = vmatprep.subr.bf16.mxu0 0
      %877 = vmatpush2.bf16.msra.mxu0 %v818
      %878 = vmatprep.subr.bf16.mxu0 0
      %879 = vmatpush2.bf16.msra.mxu0 %v817
      %880 = vmatprep.subr.bf16.mxu0 0
      %881 = vmatpush2.bf16.msra.mxu0 %v816
      %882 = vmatprep.subr.bf16.mxu0 0
      %883 = vmatpush2.bf16.msra.mxu0 %v815
      %884 = vmatprep.subr.bf16.mxu0 0
      %885 = vmatpush2.bf16.msra.mxu0 %v814
      %886 = vmatprep.mubr.bf16.mxu0 %v705
      %887 = vmatmul.mubr.bf16.gmra.mxu0 %v704
      %v888 = vpop.f32.mrf.mxu0
      %v889 = vadd.f32 %v694, %v888
      %v890 = vpop.f32.mrf.mxu0
      %v891 = vpop.f32.mrf.mxu0
      %v892 = vpop.f32.mrf.mxu0
      %893 = vdwg.mxu0
      %894 = vmatprep.subr.bf16.mxu0 0
      %895 = vmatpush1.bf16.msra.mxu0 %v829
      %896 = vmatprep.subr.bf16.mxu0 0
      %897 = vmatpush1.bf16.msra.mxu0 %v828
      %898 = vmatprep.subr.bf16.mxu0 0
      %899 = vmatpush1.bf16.msra.mxu0 %v827
      %900 = vmatprep.subr.bf16.mxu0 0
      %901 = vmatpush1.bf16.msra.mxu0 %v826
      %902 = vmatprep.subr.bf16.mxu0 0
      %903 = vmatpush1.bf16.msra.mxu0 %v825
      %904 = vmatprep.subr.bf16.mxu0 0
      %905 = vmatpush1.bf16.msra.mxu0 %v824
      %906 = vmatprep.subr.bf16.mxu0 0
      %907 = vmatpush1.bf16.msra.mxu0 %v823
      %908 = vmatprep.subr.bf16.mxu0 0
      %909 = vmatpush1.bf16.msra.mxu0 %v822
      %910 = vmatprep.subr.bf16.mxu0 0
      %911 = vmatpush2.bf16.msra.mxu0 0
      %912 = vmatprep.subr.bf16.mxu0 0
      %913 = vmatpush2.bf16.msra.mxu0 0
      %914 = vmatprep.subr.bf16.mxu0 0
      %915 = vmatpush2.bf16.msra.mxu0 0
      %916 = vmatprep.subr.bf16.mxu0 0
      %917 = vmatpush2.bf16.msra.mxu0 0
      %918 = vmatprep.subr.bf16.mxu0 0
      %919 = vmatpush2.bf16.msra.mxu0 0
      %920 = vmatprep.subr.bf16.mxu0 0
      %921 = vmatpush2.bf16.msra.mxu0 0
      %922 = vmatprep.subr.bf16.mxu0 0
      %923 = vmatpush2.bf16.msra.mxu0 0
      %924 = vmatprep.subr.bf16.mxu0 0
      %925 = vmatpush2.bf16.msra.mxu0 0
      %926 = vmatprep.mubr.bf16.mxu0 0
      %927 = vmatmul.mubr.bf16.gmra.mxu0 %v706
      %v928 = vpop.f32.mrf.mxu0
      %v929 = vadd.f32 %v889, %v928
      %v930 = vpop.f32.mrf.mxu0
      %v931 = vpop.f32.mrf.mxu0
      %v932 = vpop.f32.mrf.mxu0
      %933 = vdwg.mxu0
      %v934 = vld [vmem:[%s351] sm:$0xff]
      %v935 = vld [vmem:[%s351 + $0x8] sm:$0xf]
      %s936 = scalar_lea.vmem %s3, 384
      %v937 = vld [vmem:[%s936] sm:$0xf]
      %v938 = vld [vmem:[%s936 + $0x4] sm:$0xf]
      %v939 = vld [vmem:[%s936 + $0x8] sm:$0xf]
      %v940 = vld [vmem:[%s936 + $0xc] sm:$0xf]
      %v941 = vld [vmem:[%s936 + $0x10] sm:$0xf]
      %v942 = vld [vmem:[%s936 + $0x14] sm:$0xf]
      %v943 = vld [vmem:[%s936 + $0x18] sm:$0xf]
      %v944 = vld [vmem:[%s936 + $0x1c] sm:$0xf]
      %v945 = vld [vmem:[%s936 + $0x20] sm:$0xf]
      %v946 = vld [vmem:[%s936 + $0x24] sm:$0xf]
      %v947 = vld [vmem:[%s936 + $0x28] sm:$0xf]
      %v948 = vld [vmem:[%s936 + $0x2c] sm:$0xf]
      %v949 = vld [vmem:[%s936 + $0x30] sm:$0xf]
      %v950 = vld [vmem:[%s936 + $0x34] sm:$0xf]
      %v951 = vld [vmem:[%s936 + $0x38] sm:$0xf]
      %v952 = vld [vmem:[%s936 + $0x3c] sm:$0xf]
      %v953 = vld [vmem:[%s936 + $0x40] sm:$0xf]
      %v954 = vld [vmem:[%s936 + $0x44] sm:$0xf]
      %v955 = vld [vmem:[%s936 + $0x48] sm:$0xf]
      %v956 = vld [vmem:[%s936 + $0x4c] sm:$0xf]
      %v957 = vld [vmem:[%s936 + $0x50] sm:$0xf]
      %v958 = vld [vmem:[%s936 + $0x54] sm:$0xf]
      %v959 = vld [vmem:[%s936 + $0x58] sm:$0xf]
      %v960 = vld [vmem:[%s936 + $0x5c] sm:$0xf]
      %v961 = vld [vmem:[%s936 + $0x60] sm:$0xf]
      %v962 = vld [vmem:[%s936 + $0x64] sm:$0xf]
      %v963 = vld [vmem:[%s936 + $0x68] sm:$0xf]
      %v964 = vld [vmem:[%s936 + $0x6c] sm:$0xf]
      %v965 = vld [vmem:[%s936 + $0x70] sm:$0xf]
      %v966 = vld [vmem:[%s936 + $0x74] sm:$0xf]
      %v967 = vld [vmem:[%s936 + $0x78] sm:$0xf]
      %v968 = vld [vmem:[%s936 + $0x7c] sm:$0xf]
      %v969 = vld [vmem:[%s936 + $0x80] sm:$0xf]
      %v970 = vld [vmem:[%s936 + $0x84] sm:$0xf]
      %v971 = vld [vmem:[%s936 + $0x88] sm:$0xf]
      %v972 = vld [vmem:[%s936 + $0x8c] sm:$0xf]
      %v973 = vld [vmem:[%s936 + $0x90] sm:$0xf]
      %v974 = vld [vmem:[%s936 + $0x94] sm:$0xf]
      %v975 = vld [vmem:[%s936 + $0x98] sm:$0xf]
      %v976 = vld [vmem:[%s936 + $0x9c] sm:$0xf]
      %v977 = vld [vmem:[%s936 + $0xa0] sm:$0xf]
      %v978 = vld [vmem:[%s936 + $0xa4] sm:$0xf]
      %v979 = vld [vmem:[%s936 + $0xa8] sm:$0xf]
      %v980 = vld [vmem:[%s936 + $0xac] sm:$0xf]
      %v981 = vld [vmem:[%s936 + $0xb0] sm:$0xf]
      %v982 = vld [vmem:[%s936 + $0xb4] sm:$0xf]
      %v983 = vld [vmem:[%s936 + $0xb8] sm:$0xf]
      %v984 = vld [vmem:[%s936 + $0xbc] sm:$0xf]
      %v987 = vunpack.c.l.b16 %v934
      %v988 = vunpack.c.h.b16 %v934
      %v989 = vunpack.c.l.b16 %v935
      %v990 = vpack.c.b16 %v987, %v987
      %v991 = vpack.c.b16 %v988, %v988
      %v992 = vpack.c.b16 %v989, %v989
      %v1044 = vunpack.c.l.b16 %v937
      %v1045 = vunpack.c.l.b16 %v938
      %v1046 = vunpack.c.l.b16 %v939
      %v1047 = vunpack.c.l.b16 %v940
      %v1048 = vunpack.c.l.b16 %v941
      %v1049 = vunpack.c.l.b16 %v942
      %v1050 = vunpack.c.l.b16 %v943
      %v1051 = vunpack.c.l.b16 %v944
      %v1052 = vunpack.c.l.b16 %v945
      %v1053 = vunpack.c.l.b16 %v946
      %v1054 = vunpack.c.l.b16 %v947
      %v1055 = vunpack.c.l.b16 %v948
      %v1056 = vunpack.c.l.b16 %v949
      %v1057 = vunpack.c.l.b16 %v950
      %v1058 = vunpack.c.l.b16 %v951
      %v1059 = vunpack.c.l.b16 %v952
      %v1060 = vunpack.c.l.b16 %v953
      %v1061 = vunpack.c.l.b16 %v954
      %v1062 = vunpack.c.l.b16 %v955
      %v1063 = vunpack.c.l.b16 %v956
      %v1064 = vunpack.c.l.b16 %v957
      %v1065 = vunpack.c.l.b16 %v958
      %v1066 = vunpack.c.l.b16 %v959
      %v1067 = vunpack.c.l.b16 %v960
      %v1068 = vunpack.c.l.b16 %v961
      %v1069 = vunpack.c.l.b16 %v962
      %v1070 = vunpack.c.l.b16 %v963
      %v1071 = vunpack.c.l.b16 %v964
      %v1072 = vunpack.c.l.b16 %v965
      %v1073 = vunpack.c.l.b16 %v966
      %v1074 = vunpack.c.l.b16 %v967
      %v1075 = vunpack.c.l.b16 %v968
      %v1076 = vunpack.c.l.b16 %v969
      %v1077 = vunpack.c.l.b16 %v970
      %v1078 = vunpack.c.l.b16 %v971
      %v1079 = vunpack.c.l.b16 %v972
      %v1080 = vunpack.c.l.b16 %v973
      %v1081 = vunpack.c.l.b16 %v974
      %v1082 = vunpack.c.l.b16 %v975
      %v1083 = vunpack.c.l.b16 %v976
      %v1084 = vunpack.c.l.b16 %v977
      %v1085 = vunpack.c.l.b16 %v978
      %v1086 = vunpack.c.l.b16 %v979
      %v1087 = vunpack.c.l.b16 %v980
      %v1088 = vunpack.c.l.b16 %v981
      %v1089 = vunpack.c.l.b16 %v982
      %v1090 = vunpack.c.l.b16 %v983
      %v1091 = vunpack.c.l.b16 %v984
      %v1092 = vpack.c.b16 %v1045, %v1044
      %v1093 = vpack.c.b16 %v1047, %v1046
      %v1094 = vpack.c.b16 %v1049, %v1048
      %v1095 = vpack.c.b16 %v1051, %v1050
      %v1096 = vpack.c.b16 %v1053, %v1052
      %v1097 = vpack.c.b16 %v1055, %v1054
      %v1098 = vpack.c.b16 %v1057, %v1056
      %v1099 = vpack.c.b16 %v1059, %v1058
      %v1100 = vpack.c.b16 %v1061, %v1060
      %v1101 = vpack.c.b16 %v1063, %v1062
      %v1102 = vpack.c.b16 %v1065, %v1064
      %v1103 = vpack.c.b16 %v1067, %v1066
      %v1104 = vpack.c.b16 %v1069, %v1068
      %v1105 = vpack.c.b16 %v1071, %v1070
      %v1106 = vpack.c.b16 %v1073, %v1072
      %v1107 = vpack.c.b16 %v1075, %v1074
      %v1108 = vpack.c.b16 %v1077, %v1076
      %v1109 = vpack.c.b16 %v1079, %v1078
      %v1110 = vpack.c.b16 %v1081, %v1080
      %v1111 = vpack.c.b16 %v1083, %v1082
      %v1112 = vpack.c.b16 %v1085, %v1084
      %v1113 = vpack.c.b16 %v1087, %v1086
      %v1114 = vpack.c.b16 %v1089, %v1088
      %v1115 = vpack.c.b16 %v1091, %v1090
      %1140 = vmatprep.subr.bf16.mxu0 0
      %1141 = vmatpush1.bf16.msra.mxu0 %v1099
      %1142 = vmatprep.subr.bf16.mxu0 0
      %1143 = vmatpush1.bf16.msra.mxu0 %v1098
      %1144 = vmatprep.subr.bf16.mxu0 0
      %1145 = vmatpush1.bf16.msra.mxu0 %v1097
      %1146 = vmatprep.subr.bf16.mxu0 0
      %1147 = vmatpush1.bf16.msra.mxu0 %v1096
      %1148 = vmatprep.subr.bf16.mxu0 0
      %1149 = vmatpush1.bf16.msra.mxu0 %v1095
      %1150 = vmatprep.subr.bf16.mxu0 0
      %1151 = vmatpush1.bf16.msra.mxu0 %v1094
      %1152 = vmatprep.subr.bf16.mxu0 0
      %1153 = vmatpush1.bf16.msra.mxu0 %v1093
      %1154 = vmatprep.subr.bf16.mxu0 0
      %1155 = vmatpush1.bf16.msra.mxu0 %v1092
      %1156 = vmatprep.subr.bf16.mxu0 0
      %1157 = vmatpush2.bf16.msra.mxu0 %v1107
      %1158 = vmatprep.subr.bf16.mxu0 0
      %1159 = vmatpush2.bf16.msra.mxu0 %v1106
      %1160 = vmatprep.subr.bf16.mxu0 0
      %1161 = vmatpush2.bf16.msra.mxu0 %v1105
      %1162 = vmatprep.subr.bf16.mxu0 0
      %1163 = vmatpush2.bf16.msra.mxu0 %v1104
      %1164 = vmatprep.subr.bf16.mxu0 0
      %1165 = vmatpush2.bf16.msra.mxu0 %v1103
      %1166 = vmatprep.subr.bf16.mxu0 0
      %1167 = vmatpush2.bf16.msra.mxu0 %v1102
      %1168 = vmatprep.subr.bf16.mxu0 0
      %1169 = vmatpush2.bf16.msra.mxu0 %v1101
      %1170 = vmatprep.subr.bf16.mxu0 0
      %1171 = vmatpush2.bf16.msra.mxu0 %v1100
      %1172 = vmatprep.mubr.bf16.mxu0 %v991
      %1173 = vmatmul.mubr.bf16.gmra.mxu0 %v990
      %v1174 = vpop.f32.mrf.mxu0
      %v1175 = vadd.f32 0.0, %v1174
      %v1176 = vpop.f32.mrf.mxu0
      %v1177 = vpop.f32.mrf.mxu0
      %v1178 = vpop.f32.mrf.mxu0
      %1179 = vdwg.mxu0
      %1180 = vmatprep.subr.bf16.mxu0 0
      %1181 = vmatpush1.bf16.msra.mxu0 %v1115
      %1182 = vmatprep.subr.bf16.mxu0 0
      %1183 = vmatpush1.bf16.msra.mxu0 %v1114
      %1184 = vmatprep.subr.bf16.mxu0 0
      %1185 = vmatpush1.bf16.msra.mxu0 %v1113
      %1186 = vmatprep.subr.bf16.mxu0 0
      %1187 = vmatpush1.bf16.msra.mxu0 %v1112
      %1188 = vmatprep.subr.bf16.mxu0 0
      %1189 = vmatpush1.bf16.msra.mxu0 %v1111
      %1190 = vmatprep.subr.bf16.mxu0 0
      %1191 = vmatpush1.bf16.msra.mxu0 %v1110
      %1192 = vmatprep.subr.bf16.mxu0 0
      %1193 = vmatpush1.bf16.msra.mxu0 %v1109
      %1194 = vmatprep.subr.bf16.mxu0 0
      %1195 = vmatpush1.bf16.msra.mxu0 %v1108
      %1196 = vmatprep.subr.bf16.mxu0 0
      %1197 = vmatpush2.bf16.msra.mxu0 0
      %1198 = vmatprep.subr.bf16.mxu0 0
      %1199 = vmatpush2.bf16.msra.mxu0 0
      %1200 = vmatprep.subr.bf16.mxu0 0
      %1201 = vmatpush2.bf16.msra.mxu0 0
      %1202 = vmatprep.subr.bf16.mxu0 0
      %1203 = vmatpush2.bf16.msra.mxu0 0
      %1204 = vmatprep.subr.bf16.mxu0 0
      %1205 = vmatpush2.bf16.msra.mxu0 0
      %1206 = vmatprep.subr.bf16.mxu0 0
      %1207 = vmatpush2.bf16.msra.mxu0 0
      %1208 = vmatprep.subr.bf16.mxu0 0
      %1209 = vmatpush2.bf16.msra.mxu0 0
      %1210 = vmatprep.subr.bf16.mxu0 0
      %1211 = vmatpush2.bf16.msra.mxu0 0
      %1212 = vmatprep.mubr.bf16.mxu0 0
      %1213 = vmatmul.mubr.bf16.gmra.mxu0 %v992
      %v1214 = vpop.f32.mrf.mxu0
      %v1215 = vadd.f32 %v1175, %v1214
      %v1216 = vpop.f32.mrf.mxu0
      %v1217 = vpop.f32.mrf.mxu0
      %v1218 = vpop.f32.mrf.mxu0
      %1219 = vdwg.mxu0
      %v1220 = vadd.f32 %v929, %v1215
      %v1221 = vld [vmem:[%s4] sm:$0x1]
      %v1223 = vlaneseq
      %v1224 = vshrl.u32 %v1223, 7
      %v1225 = vsub.s32 0, %v1224
      %v1226 = vrot.slane %v1221, %v1225
      %v1228 = vadd.f32 %v1220, %v1226
      %v1229 = vmax.f32 %v1228, 0.0
      %v1230 = vpack.c.bf16 %v1229, %v1229
      %1231 = vst [vmem:[%s361] sm:$0xf] %v1230
      %p1232 = scmp.lt.s32.totalorder %s20, 1
      %s1233 = scalar_select %p1232, %s20, 1
      %p1234 = scmp.lt.s32.totalorder %s21, 7
      %s1235 = scalar_select %p1234, %s21, 7
      %s1236 = smul.addr %s1233, 8
      %s1237 = sadd.s32 %s1235, %s1236
      %s1238 = smul.addr %s1237, 4
      %s1239 = scalar_lea.vmem %s5, %s1238
      // Predicated region
      $region41: #{bottleneck_forward.4} parent=39 // pred_check
        %p1240 = pneg %p184
      $region42: #{bottleneck_forward.4} parent=39 // pred_check_branch
        %1242 = sbr.rel (%p1240) target = $region44
      $region43: #{bottleneck_forward.4} parent=39 // pred_region
        _
      $region44: #{bottleneck_forward.4} parent=39 // pred_fallthru
        _
    $region40: #{bottleneck_forward.4} parent=5 // pred_fallthru
      _
    %p1243 = scmp.le.s32.totalorder 2, %s11
    // Predicated region
    $region45: #{bottleneck_forward.4} parent=5 // pred_check
      %p1244 = pneg %p1243
    $region46: #{bottleneck_forward.4} parent=5 // pred_check_branch
      %1246 = sbr.rel (%p1244) target = $region48
    $region47: #{bottleneck_forward.4} parent=5 // pred_region
      %s1247 = ssub.s32 %s11, 2
      // Predicated region
      $region49: #{bottleneck_forward.4} parent=47 // pred_check
        %p1248 = pneg %p190
      $region50: #{bottleneck_forward.4} parent=47 // pred_check_branch
        %1250 = sbr.rel (%p1248) target = $region52
      $region51: #{bottleneck_forward.4} parent=47 // pred_region
        %p1251 = scmp.lt.s32.totalorder %s22, 1
        %s1252 = scalar_select %p1251, %s22, 1
        %p1253 = scmp.lt.s32.totalorder %s23, 7
        %s1254 = scalar_select %p1253, %s23, 7
        %s1255 = smul.addr %s1252, 8
        %s1256 = sadd.s32 %s1254, %s1255
        %s1257 = smul.addr %s1256, 4
        %s1258 = scalar_lea.vmem %s5, %s1257
      $region52: #{bottleneck_forward.4} parent=47 // pred_fallthru
        _
    $region48: #{bottleneck_forward.4} parent=5 // pred_fallthru
      _
  $region6: #{bottleneck_forward.4} parent=0 // loop_footer
    %s15 = sadd.s32 1, %s11
  $region7: #{bottleneck_forward.4} parent=0 // loop_footer_branch
    %10 = sbr.rel target = $region3
  $region8: #{bottleneck_forward.4} parent=0 // loop_exit
    _

</llo_original>
